<compile_context>
chip_gen: v6e
topology: v6e:2x2x1
jax: 0.10.0
libtpu: 0.0.40
codegen_flags: <defaults>
</compile_context>

<pallas_src>
import functools

import jax
import jax.numpy as jnp
from jax.experimental import pallas as pl
from jax.experimental.pallas import tpu as pltpu


def _round_up(a, b):
    return ((a + b - 1) // b) * b


def _block_diag(a, b):
    """[[a, 0], [0, b]] -- used to fuse the loc / pi head layers 2 and 3."""
    out = jnp.zeros((a.shape[0] + b.shape[0], a.shape[1] + b.shape[1]), a.dtype)
    out = out.at[:a.shape[0], :a.shape[1]].set(a)
    out = out.at[a.shape[0]:, a.shape[1]:].set(b)
    return out


def _mmd_kernel(x_ref,
                wp_ref, bp_ref,
                w1_ref, b1_ref, w2_ref, b2_ref, w3_ref, b3_ref,
                out_ref, *, embed_dim, future_steps):
    """One row tile of the full forward pass (all big matmuls on the MXU)."""
    f32 = jnp.float32
    bf16 = jnp.bfloat16
    D = embed_dim
    F2 = 2 * future_steps
    tm = out_ref.shape[0]

    # One wide projection matmul (TM, D) x (D, 6D), f32 accumulation, then cast
    # straight to bf16 -- every consumer is bf16.
    x = x_ref[...]                                              # (TM, D) bf16
    h_wide = (jnp.dot(x, wp_ref[...], preferred_element_type=f32)
              + bp_ref[...]).astype(bf16)                       # (TM, 6D) bf16

    w1 = w1_ref[...]; b1 = b1_ref[...]                          # (D, 4D)
    w2 = w2_ref[...]; b2 = b2_ref[...]                          # (4D, 2D)
    w3 = w3_ref[...]; b3 = b3_ref[...]                          # (2D, 2F+1)

    loc_parts = []
    pi_parts = []
    for m in range(6):                        # static unroll over the 6 modes
        # projection chunk for mode m  ==  .view(-1, 6, D)[:, m, :]
        h = h_wide[:, m * D:(m + 1) * D]                        # (TM, D) bf16

        # fused heads: 3 matmuls per mode, f32 accumulation, bf16 re-cast
        t1 = jnp.maximum(jnp.dot(h, w1, preferred_element_type=f32) + b1,
                         0.0).astype(bf16)                      # (TM, 4D)
        t2 = jnp.maximum(jnp.dot(t1, w2, preferred_element_type=f32) + b2,
                         0.0).astype(bf16)                      # (TM, 2D)
        t3 = jnp.dot(t2, w3, preferred_element_type=f32) + b3   # (TM, 2F+1) f32

        loc_parts.append(t3[:, :F2])                            # (TM, 2F)
        pi_parts.append(t3[:, F2:F2 + 1])                       # (TM, 1)

    # Single lane-dense store per tile: [loc_0..loc_5, pi_0..pi_5, zero pad].
    pad = out_ref.shape[1] - (6 * F2 + 6)
    pieces = loc_parts + pi_parts
    if pad > 0:
        pieces.append(jnp.zeros((tm, pad), f32))
    out_ref[...] = jnp.concatenate(pieces, axis=-1)


def _const_spec(a):
    """Full-array, grid-invariant BlockSpec; single-buffered when supported."""
    nd = a.ndim
    idx = lambda i, _nd=nd: (0,) * _nd
    try:
        return pl.BlockSpec(a.shape, idx, pipeline_mode=pl.Buffered(1))
    except (AttributeError, TypeError):
        return pl.BlockSpec(a.shape, idx)


def multimodal_decoder(x, params, *, embed_dim, future_steps, tm=512):
    """x: (N, embed_dim) f32.  Returns (loc (N, 6, F, 2), pi (N, 6))."""
    N, D = x.shape
    assert D == embed_dim
    F = future_steps
    F2 = 2 * F

    (wp, bp, wl1, bl1, wl2, bl2, wl3, bl3,
     wq1, bq1, wq2, bq2, wq3, bq3) = params

    bf16 = jnp.bfloat16

    # --- head fusion (done once in the wrapper, zero kernel cost) ----------
    w1 = jnp.concatenate([wl1, wq1], axis=1)            # (D, 4D)
    b1 = jnp.concatenate([bl1, bq1], axis=-1)            # (1, 4D) f32
    w2 = _block_diag(wl2, wq2)                           # (4D, 2D)
    b2 = jnp.concatenate([bl2, bq2], axis=-1)            # (1, 2D) f32
    w3 = _block_diag(wl3, wq3)                           # (2D, 2F+1)
    b3 = jnp.concatenate([bl3, bq3], axis=-1)            # (1, 2F+1) f32

    # bf16 operands for the MXU (f32 accumulation inside the kernel).
    x_b = x.astype(bf16)
    wp_b = wp.astype(bf16)
    w1_b, w2_b, w3_b = w1.astype(bf16), w2.astype(bf16), w3.astype(bf16)

    # --- row-tile selection: >= 2 grid steps when N allows, 16-row aligned --
    if N <= 16:
        tm_eff = 16
    else:
        tm_eff = min(_round_up(tm, 16), _round_up(pl.cdiv(N, 2), 16))
    n_pad = _round_up(N, tm_eff)
    if n_pad != N:
        x_b = jnp.pad(x_b, ((0, n_pad - N), (0, 0)))

    out_w = _round_up(6 * F2 + 6, 128)        # lane-dense combined output slab
    grid = (n_pad // tm_eff,)
    kernel = functools.partial(_mmd_kernel, embed_dim=D, future_steps=F)

    # Explicit VMEM budget (weights + double-buffered x/out tiles + headroom),
    # clamped to stay inside every generation's scoped limit.
    weights = (wp_b, bp, w1_b, b1, w2_b, b2, w3_b, b3)
    weight_bytes = sum(int(a.size) * a.dtype.itemsize for a in weights)
    tile_bytes = 2 * (tm_eff * D * 2) + 2 * (tm_eff * out_w * 4)
    vmem_limit = int(min(max(2 * weight_bytes + tile_bytes + (8 << 20),
                             16 << 20), 32 << 20))

    out = pl.pallas_call(
        kernel,
        out_shape=jax.ShapeDtypeStruct((n_pad, out_w), jnp.float32),
        grid_spec=pltpu.PrefetchScalarGridSpec(
            num_scalar_prefetch=0,
            grid=grid,
            in_specs=[
                pl.BlockSpec((tm_eff, D), lambda i: (i, 0)),   # x row tile
                _const_spec(wp_b), _const_spec(bp),
                _const_spec(w1_b), _const_spec(b1),
                _const_spec(w2_b), _const_spec(b2),
                _const_spec(w3_b), _const_spec(b3),
            ],
            out_specs=pl.BlockSpec((tm_eff, out_w), lambda i: (i, 0)),
        ),
        compiler_params=pltpu.CompilerParams(
            dimension_semantics=("parallel",),     # row tiles are independent
            vmem_limit_bytes=vmem_limit),
    )(x_b, wp_b, bp, w1_b, b1, w2_b, b2, w3_b, b3)

    out = out[:N]
    loc = out[:, :6 * F2].reshape(N, 6, F, 2)
    pi = out[:, 6 * F2:6 * F2 + 6]
    return loc, pi


def init_params(key, embed_dim, future_steps):
    """Deterministic synthetic parameters. Weights stored as (in, out)."""
    D, F = embed_dim, future_steps
    shapes = [
        (D, 6 * D), (6 * D,),          # multimodal_proj
        (D, 2 * D), (2 * D,),          # loc[0]
        (2 * D, D), (D,),              # loc[2]
        (D, F * 2), (F * 2,),          # loc[4]
        (D, 2 * D), (2 * D,),          # pi[0]
        (2 * D, D), (D,),              # pi[2]
        (D, 1), (1,),                  # pi[4]
    ]
    keys = jax.random.split(key, len(shapes))
    params = []
    for k, s in zip(keys, shapes):
        p = (0.05 * jax.random.normal(k, s, dtype=jnp.float32))
        if p.ndim == 1:                # biases as (1, K) for clean VMEM layout
            p = p.reshape(1, -1)
        params.append(p)
    return tuple(params)


def reference_forward(x, params, *, embed_dim, future_steps):
    """Pure-JAX reference replicating the PyTorch forward, using the same
    bf16 operand precision / f32 accumulation as the kernel."""
    (wp, bp, wl1, bl1, wl2, bl2, wl3, bl3,
     wq1, bq1, wq2, bq2, wq3, bq3) = params
    D, F = embed_dim, future_steps

    def mm(a, w):
        return jnp.matmul(a.astype(jnp.bfloat16), w.astype(jnp.bfloat16),
                          preferred_element_type=jnp.float32)

    h = (mm(x, wp) + bp).reshape(-1, 6, D)                    # (N, 6, D)
    a = jax.nn.relu(mm(h, wl1) + bl1)
    b = jax.nn.relu(mm(a, wl2) + bl2)
    loc = (mm(b, wl3) + bl3).reshape(-1, 6, F, 2)
    c = jax.nn.relu(mm(h, wq1) + bq1)
    d = jax.nn.relu(mm(c, wq2) + bq2)
    pi = (mm(d, wq3) + bq3)[..., 0]                           # (N, 6)
    return loc, pi


if __name__ == "__main__":
    embed_dim = 32
    future_steps = 8

    key = jax.random.PRNGKey(0)
    kx1, kp, kx2 = jax.random.split(key, 3)
    params = init_params(kp, embed_dim, future_steps)

    # Case 1: tiny N -> single grid step.
    N1 = 16
    x1 = jax.random.normal(kx1, (N1, embed_dim), dtype=jnp.float32)
    loc1, pi1 = multimodal_decoder(x1, params, embed_dim=embed_dim,
                                   future_steps=future_steps)
    jax.block_until_ready((loc1, pi1))
    loc1_ref, pi1_ref = reference_forward(x1, params, embed_dim=embed_dim,
                                          future_steps=future_steps)
    assert loc1.shape == (N1, 6, future_steps, 2)
    assert pi1.shape == (N1, 6)
    assert jnp.allclose(loc1, loc1_ref, atol=1e-4, rtol=1e-3)
    assert jnp.allclose(pi1, pi1_ref, atol=1e-4, rtol=1e-3)

    # Case 2: N not a multiple of the tile -> exercises padding + grid > 1.
    N2 = 40
    x2 = jax.random.normal(kx2, (N2, embed_dim), dtype=jnp.float32)
    loc2, pi2 = multimodal_decoder(x2, params, embed_dim=embed_dim,
                                   future_steps=future_steps, tm=16)
    jax.block_until_ready((loc2, pi2))
    loc2_ref, pi2_ref = reference_forward(x2, params, embed_dim=embed_dim,
                                          future_steps=future_steps)
    assert loc2.shape == (N2, 6, future_steps, 2)
    assert pi2.shape == (N2, 6)
    assert jnp.allclose(loc2, loc2_ref, atol=1e-4, rtol=1e-3)
    assert jnp.allclose(pi2, pi2_ref, atol=1e-4, rtol=1e-3)

    print("KERNEL_OK")
</pallas_src>

<mosaic_0001>
module attributes {stable_mosaic.version = 11 : i64} {
  func.func @_mmd_kernel(%arg0: i32, %arg1: memref<16x32xbf16, #tpu.memory_space<vmem>>, %arg2: memref<32x192xbf16, #tpu.memory_space<vmem>>, %arg3: memref<1x192xf32, #tpu.memory_space<vmem>>, %arg4: memref<32x128xbf16, #tpu.memory_space<vmem>>, %arg5: memref<1x128xf32, #tpu.memory_space<vmem>>, %arg6: memref<128x64xbf16, #tpu.memory_space<vmem>>, %arg7: memref<1x64xf32, #tpu.memory_space<vmem>>, %arg8: memref<64x17xbf16, #tpu.memory_space<vmem>>, %arg9: memref<1x17xf32, #tpu.memory_space<vmem>>, %arg10: memref<16x128xf32, #tpu.memory_space<vmem>>) attributes {dimension_semantics = [#tpu.dimension_semantics<parallel>], iteration_bounds = array<i64: 1>, scalar_prefetch = 0 : i64, scratch_operands = 0 : i64, tpu.core_type = #tpu.core_type<tc>, window_params = [{transform_indices = @transform_0, window_bounds = array<i64: 16, 32>}, {pipeline_mode = #tpu.pipeline_mode<synchronous>, transform_indices = @transform_1, window_bounds = array<i64: 32, 192>}, {pipeline_mode = #tpu.pipeline_mode<synchronous>, transform_indices = @transform_2, window_bounds = array<i64: 1, 192>}, {pipeline_mode = #tpu.pipeline_mode<synchronous>, transform_indices = @transform_3, window_bounds = array<i64: 32, 128>}, {pipeline_mode = #tpu.pipeline_mode<synchronous>, transform_indices = @transform_4, window_bounds = array<i64: 1, 128>}, {pipeline_mode = #tpu.pipeline_mode<synchronous>, transform_indices = @transform_5, window_bounds = array<i64: 128, 64>}, {pipeline_mode = #tpu.pipeline_mode<synchronous>, transform_indices = @transform_6, window_bounds = array<i64: 1, 64>}, {pipeline_mode = #tpu.pipeline_mode<synchronous>, transform_indices = @transform_7, window_bounds = array<i64: 64, 17>}, {pipeline_mode = #tpu.pipeline_mode<synchronous>, transform_indices = @transform_8, window_bounds = array<i64: 1, 17>}, {transform_indices = @transform_9, window_bounds = array<i64: 16, 128>}]} {
    %c0 = arith.constant 0 : index
    %c0_0 = arith.constant 0 : index
    %0 = vector.load %arg1[%c0, %c0_0] : memref<16x32xbf16, #tpu.memory_space<vmem>>, vector<16x32xbf16>
    %c0_1 = arith.constant 0 : index
    %c0_2 = arith.constant 0 : index
    %1 = vector.load %arg2[%c0_1, %c0_2] : memref<32x192xbf16, #tpu.memory_space<vmem>>, vector<32x192xbf16>
    %cst = arith.constant dense<0.000000e+00> : vector<16x192xf32>
    %2 = tpu.matmul %0, %1, %cst {dimension_numbers = #tpu.dot_dimension_numbers<[1], [0], [0], [1], [0, 0, 1, 1], [], []>} : vector<16x32xbf16>, vector<32x192xbf16>, vector<16x192xf32> -> vector<16x192xf32>
    %c0_3 = arith.constant 0 : index
    %c0_4 = arith.constant 0 : index
    %3 = vector.load %arg3[%c0_3, %c0_4] : memref<1x192xf32, #tpu.memory_space<vmem>>, vector<1x192xf32>
    %4 = vector.broadcast %3 : vector<1x192xf32> to vector<16x192xf32>
    %5 = arith.addf %2, %4 : vector<16x192xf32>
    %6 = arith.truncf %5 : vector<16x192xf32> to vector<16x192xbf16>
    %c0_5 = arith.constant 0 : index
    %c0_6 = arith.constant 0 : index
    %7 = vector.load %arg4[%c0_5, %c0_6] : memref<32x128xbf16, #tpu.memory_space<vmem>>, vector<32x128xbf16>
    %c0_7 = arith.constant 0 : index
    %c0_8 = arith.constant 0 : index
    %8 = vector.load %arg5[%c0_7, %c0_8] : memref<1x128xf32, #tpu.memory_space<vmem>>, vector<1x128xf32>
    %c0_9 = arith.constant 0 : index
    %c0_10 = arith.constant 0 : index
    %9 = vector.load %arg6[%c0_9, %c0_10] : memref<128x64xbf16, #tpu.memory_space<vmem>>, vector<128x64xbf16>
    %c0_11 = arith.constant 0 : index
    %c0_12 = arith.constant 0 : index
    %10 = vector.load %arg7[%c0_11, %c0_12] : memref<1x64xf32, #tpu.memory_space<vmem>>, vector<1x64xf32>
    %c0_13 = arith.constant 0 : index
    %c0_14 = arith.constant 0 : index
    %11 = vector.load %arg8[%c0_13, %c0_14] : memref<64x17xbf16, #tpu.memory_space<vmem>>, vector<64x17xbf16>
    %c0_15 = arith.constant 0 : index
    %c0_16 = arith.constant 0 : index
    %12 = vector.load %arg9[%c0_15, %c0_16] : memref<1x17xf32, #tpu.memory_space<vmem>>, vector<1x17xf32>
    %13 = vector.extract_strided_slice %6 {offsets = [0, 0], sizes = [16, 32], strides = [1, 1]} : vector<16x192xbf16> to vector<16x32xbf16>
    %cst_17 = arith.constant dense<0.000000e+00> : vector<16x128xf32>
    %14 = tpu.matmul %13, %7, %cst_17 {dimension_numbers = #tpu.dot_dimension_numbers<[1], [0], [0], [1], [0, 0, 1, 1], [], []>} : vector<16x32xbf16>, vector<32x128xbf16>, vector<16x128xf32> -> vector<16x128xf32>
    %15 = vector.broadcast %8 : vector<1x128xf32> to vector<16x128xf32>
    %16 = arith.addf %14, %15 : vector<16x128xf32>
    %cst_18 = arith.constant 0.000000e+00 : f32
    %17 = vector.broadcast %cst_18 : f32 to vector<16x128xf32>
    %18 = arith.maximumf %16, %17 : vector<16x128xf32>
    %19 = arith.truncf %18 : vector<16x128xf32> to vector<16x128xbf16>
    %cst_19 = arith.constant dense<0.000000e+00> : vector<16x64xf32>
    %20 = tpu.matmul %19, %9, %cst_19 {dimension_numbers = #tpu.dot_dimension_numbers<[1], [0], [0], [1], [0, 0, 1, 1], [], []>} : vector<16x128xbf16>, vector<128x64xbf16>, vector<16x64xf32> -> vector<16x64xf32>
    %21 = vector.broadcast %10 : vector<1x64xf32> to vector<16x64xf32>
    %22 = arith.addf %20, %21 : vector<16x64xf32>
    %cst_20 = arith.constant 0.000000e+00 : f32
    %23 = vector.broadcast %cst_20 : f32 to vector<16x64xf32>
    %24 = arith.maximumf %22, %23 : vector<16x64xf32>
    %25 = arith.truncf %24 : vector<16x64xf32> to vector<16x64xbf16>
    %cst_21 = arith.constant dense<0.000000e+00> : vector<16x17xf32>
    %26 = tpu.matmul %25, %11, %cst_21 {dimension_numbers = #tpu.dot_dimension_numbers<[1], [0], [0], [1], [0, 0, 1, 1], [], []>} : vector<16x64xbf16>, vector<64x17xbf16>, vector<16x17xf32> -> vector<16x17xf32>
    %27 = vector.broadcast %12 : vector<1x17xf32> to vector<16x17xf32>
    %28 = arith.addf %26, %27 : vector<16x17xf32>
    %29 = vector.extract_strided_slice %28 {offsets = [0, 0], sizes = [16, 16], strides = [1, 1]} : vector<16x17xf32> to vector<16x16xf32>
    %30 = vector.extract_strided_slice %28 {offsets = [0, 16], sizes = [16, 1], strides = [1, 1]} : vector<16x17xf32> to vector<16x1xf32>
    %31 = vector.extract_strided_slice %6 {offsets = [0, 32], sizes = [16, 32], strides = [1, 1]} : vector<16x192xbf16> to vector<16x32xbf16>
    %cst_22 = arith.constant dense<0.000000e+00> : vector<16x128xf32>
    %32 = tpu.matmul %31, %7, %cst_22 {dimension_numbers = #tpu.dot_dimension_numbers<[1], [0], [0], [1], [0, 0, 1, 1], [], []>} : vector<16x32xbf16>, vector<32x128xbf16>, vector<16x128xf32> -> vector<16x128xf32>
    %33 = vector.broadcast %8 : vector<1x128xf32> to vector<16x128xf32>
    %34 = arith.addf %32, %33 : vector<16x128xf32>
    %cst_23 = arith.constant 0.000000e+00 : f32
    %35 = vector.broadcast %cst_23 : f32 to vector<16x128xf32>
    %36 = arith.maximumf %34, %35 : vector<16x128xf32>
    %37 = arith.truncf %36 : vector<16x128xf32> to vector<16x128xbf16>
    %cst_24 = arith.constant dense<0.000000e+00> : vector<16x64xf32>
    %38 = tpu.matmul %37, %9, %cst_24 {dimension_numbers = #tpu.dot_dimension_numbers<[1], [0], [0], [1], [0, 0, 1, 1], [], []>} : vector<16x128xbf16>, vector<128x64xbf16>, vector<16x64xf32> -> vector<16x64xf32>
    %39 = vector.broadcast %10 : vector<1x64xf32> to vector<16x64xf32>
    %40 = arith.addf %38, %39 : vector<16x64xf32>
    %cst_25 = arith.constant 0.000000e+00 : f32
    %41 = vector.broadcast %cst_25 : f32 to vector<16x64xf32>
    %42 = arith.maximumf %40, %41 : vector<16x64xf32>
    %43 = arith.truncf %42 : vector<16x64xf32> to vector<16x64xbf16>
    %cst_26 = arith.constant dense<0.000000e+00> : vector<16x17xf32>
    %44 = tpu.matmul %43, %11, %cst_26 {dimension_numbers = #tpu.dot_dimension_numbers<[1], [0], [0], [1], [0, 0, 1, 1], [], []>} : vector<16x64xbf16>, vector<64x17xbf16>, vector<16x17xf32> -> vector<16x17xf32>
    %45 = vector.broadcast %12 : vector<1x17xf32> to vector<16x17xf32>
    %46 = arith.addf %44, %45 : vector<16x17xf32>
    %47 = vector.extract_strided_slice %46 {offsets = [0, 0], sizes = [16, 16], strides = [1, 1]} : vector<16x17xf32> to vector<16x16xf32>
    %48 = vector.extract_strided_slice %46 {offsets = [0, 16], sizes = [16, 1], strides = [1, 1]} : vector<16x17xf32> to vector<16x1xf32>
    %49 = vector.extract_strided_slice %6 {offsets = [0, 64], sizes = [16, 32], strides = [1, 1]} : vector<16x192xbf16> to vector<16x32xbf16>
    %cst_27 = arith.constant dense<0.000000e+00> : vector<16x128xf32>
    %50 = tpu.matmul %49, %7, %cst_27 {dimension_numbers = #tpu.dot_dimension_numbers<[1], [0], [0], [1], [0, 0, 1, 1], [], []>} : vector<16x32xbf16>, vector<32x128xbf16>, vector<16x128xf32> -> vector<16x128xf32>
    %51 = vector.broadcast %8 : vector<1x128xf32> to vector<16x128xf32>
    %52 = arith.addf %50, %51 : vector<16x128xf32>
    %cst_28 = arith.constant 0.000000e+00 : f32
    %53 = vector.broadcast %cst_28 : f32 to vector<16x128xf32>
    %54 = arith.maximumf %52, %53 : vector<16x128xf32>
    %55 = arith.truncf %54 : vector<16x128xf32> to vector<16x128xbf16>
    %cst_29 = arith.constant dense<0.000000e+00> : vector<16x64xf32>
    %56 = tpu.matmul %55, %9, %cst_29 {dimension_numbers = #tpu.dot_dimension_numbers<[1], [0], [0], [1], [0, 0, 1, 1], [], []>} : vector<16x128xbf16>, vector<128x64xbf16>, vector<16x64xf32> -> vector<16x64xf32>
    %57 = vector.broadcast %10 : vector<1x64xf32> to vector<16x64xf32>
    %58 = arith.addf %56, %57 : vector<16x64xf32>
    %cst_30 = arith.constant 0.000000e+00 : f32
    %59 = vector.broadcast %cst_30 : f32 to vector<16x64xf32>
    %60 = arith.maximumf %58, %59 : vector<16x64xf32>
    %61 = arith.truncf %60 : vector<16x64xf32> to vector<16x64xbf16>
    %cst_31 = arith.constant dense<0.000000e+00> : vector<16x17xf32>
    %62 = tpu.matmul %61, %11, %cst_31 {dimension_numbers = #tpu.dot_dimension_numbers<[1], [0], [0], [1], [0, 0, 1, 1], [], []>} : vector<16x64xbf16>, vector<64x17xbf16>, vector<16x17xf32> -> vector<16x17xf32>
    %63 = vector.broadcast %12 : vector<1x17xf32> to vector<16x17xf32>
    %64 = arith.addf %62, %63 : vector<16x17xf32>
    %65 = vector.extract_strided_slice %64 {offsets = [0, 0], sizes = [16, 16], strides = [1, 1]} : vector<16x17xf32> to vector<16x16xf32>
    %66 = vector.extract_strided_slice %64 {offsets = [0, 16], sizes = [16, 1], strides = [1, 1]} : vector<16x17xf32> to vector<16x1xf32>
    %67 = vector.extract_strided_slice %6 {offsets = [0, 96], sizes = [16, 32], strides = [1, 1]} : vector<16x192xbf16> to vector<16x32xbf16>
    %cst_32 = arith.constant dense<0.000000e+00> : vector<16x128xf32>
    %68 = tpu.matmul %67, %7, %cst_32 {dimension_numbers = #tpu.dot_dimension_numbers<[1], [0], [0], [1], [0, 0, 1, 1], [], []>} : vector<16x32xbf16>, vector<32x128xbf16>, vector<16x128xf32> -> vector<16x128xf32>
    %69 = vector.broadcast %8 : vector<1x128xf32> to vector<16x128xf32>
    %70 = arith.addf %68, %69 : vector<16x128xf32>
    %cst_33 = arith.constant 0.000000e+00 : f32
    %71 = vector.broadcast %cst_33 : f32 to vector<16x128xf32>
    %72 = arith.maximumf %70, %71 : vector<16x128xf32>
    %73 = arith.truncf %72 : vector<16x128xf32> to vector<16x128xbf16>
    %cst_34 = arith.constant dense<0.000000e+00> : vector<16x64xf32>
    %74 = tpu.matmul %73, %9, %cst_34 {dimension_numbers = #tpu.dot_dimension_numbers<[1], [0], [0], [1], [0, 0, 1, 1], [], []>} : vector<16x128xbf16>, vector<128x64xbf16>, vector<16x64xf32> -> vector<16x64xf32>
    %75 = vector.broadcast %10 : vector<1x64xf32> to vector<16x64xf32>
    %76 = arith.addf %74, %75 : vector<16x64xf32>
    %cst_35 = arith.constant 0.000000e+00 : f32
    %77 = vector.broadcast %cst_35 : f32 to vector<16x64xf32>
    %78 = arith.maximumf %76, %77 : vector<16x64xf32>
    %79 = arith.truncf %78 : vector<16x64xf32> to vector<16x64xbf16>
    %cst_36 = arith.constant dense<0.000000e+00> : vector<16x17xf32>
    %80 = tpu.matmul %79, %11, %cst_36 {dimension_numbers = #tpu.dot_dimension_numbers<[1], [0], [0], [1], [0, 0, 1, 1], [], []>} : vector<16x64xbf16>, vector<64x17xbf16>, vector<16x17xf32> -> vector<16x17xf32>
    %81 = vector.broadcast %12 : vector<1x17xf32> to vector<16x17xf32>
    %82 = arith.addf %80, %81 : vector<16x17xf32>
    %83 = vector.extract_strided_slice %82 {offsets = [0, 0], sizes = [16, 16], strides = [1, 1]} : vector<16x17xf32> to vector<16x16xf32>
    %84 = vector.extract_strided_slice %82 {offsets = [0, 16], sizes = [16, 1], strides = [1, 1]} : vector<16x17xf32> to vector<16x1xf32>
    %85 = vector.extract_strided_slice %6 {offsets = [0, 128], sizes = [16, 32], strides = [1, 1]} : vector<16x192xbf16> to vector<16x32xbf16>
    %cst_37 = arith.constant dense<0.000000e+00> : vector<16x128xf32>
    %86 = tpu.matmul %85, %7, %cst_37 {dimension_numbers = #tpu.dot_dimension_numbers<[1], [0], [0], [1], [0, 0, 1, 1], [], []>} : vector<16x32xbf16>, vector<32x128xbf16>, vector<16x128xf32> -> vector<16x128xf32>
    %87 = vector.broadcast %8 : vector<1x128xf32> to vector<16x128xf32>
    %88 = arith.addf %86, %87 : vector<16x128xf32>
    %cst_38 = arith.constant 0.000000e+00 : f32
    %89 = vector.broadcast %cst_38 : f32 to vector<16x128xf32>
    %90 = arith.maximumf %88, %89 : vector<16x128xf32>
    %91 = arith.truncf %90 : vector<16x128xf32> to vector<16x128xbf16>
    %cst_39 = arith.constant dense<0.000000e+00> : vector<16x64xf32>
    %92 = tpu.matmul %91, %9, %cst_39 {dimension_numbers = #tpu.dot_dimension_numbers<[1], [0], [0], [1], [0, 0, 1, 1], [], []>} : vector<16x128xbf16>, vector<128x64xbf16>, vector<16x64xf32> -> vector<16x64xf32>
    %93 = vector.broadcast %10 : vector<1x64xf32> to vector<16x64xf32>
    %94 = arith.addf %92, %93 : vector<16x64xf32>
    %cst_40 = arith.constant 0.000000e+00 : f32
    %95 = vector.broadcast %cst_40 : f32 to vector<16x64xf32>
    %96 = arith.maximumf %94, %95 : vector<16x64xf32>
    %97 = arith.truncf %96 : vector<16x64xf32> to vector<16x64xbf16>
    %cst_41 = arith.constant dense<0.000000e+00> : vector<16x17xf32>
    %98 = tpu.matmul %97, %11, %cst_41 {dimension_numbers = #tpu.dot_dimension_numbers<[1], [0], [0], [1], [0, 0, 1, 1], [], []>} : vector<16x64xbf16>, vector<64x17xbf16>, vector<16x17xf32> -> vector<16x17xf32>
    %99 = vector.broadcast %12 : vector<1x17xf32> to vector<16x17xf32>
    %100 = arith.addf %98, %99 : vector<16x17xf32>
    %101 = vector.extract_strided_slice %100 {offsets = [0, 0], sizes = [16, 16], strides = [1, 1]} : vector<16x17xf32> to vector<16x16xf32>
    %102 = vector.extract_strided_slice %100 {offsets = [0, 16], sizes = [16, 1], strides = [1, 1]} : vector<16x17xf32> to vector<16x1xf32>
    %103 = vector.extract_strided_slice %6 {offsets = [0, 160], sizes = [16, 32], strides = [1, 1]} : vector<16x192xbf16> to vector<16x32xbf16>
    %cst_42 = arith.constant dense<0.000000e+00> : vector<16x128xf32>
    %104 = tpu.matmul %103, %7, %cst_42 {dimension_numbers = #tpu.dot_dimension_numbers<[1], [0], [0], [1], [0, 0, 1, 1], [], []>} : vector<16x32xbf16>, vector<32x128xbf16>, vector<16x128xf32> -> vector<16x128xf32>
    %105 = vector.broadcast %8 : vector<1x128xf32> to vector<16x128xf32>
    %106 = arith.addf %104, %105 : vector<16x128xf32>
    %cst_43 = arith.constant 0.000000e+00 : f32
    %107 = vector.broadcast %cst_43 : f32 to vector<16x128xf32>
    %108 = arith.maximumf %106, %107 : vector<16x128xf32>
    %109 = arith.truncf %108 : vector<16x128xf32> to vector<16x128xbf16>
    %cst_44 = arith.constant dense<0.000000e+00> : vector<16x64xf32>
    %110 = tpu.matmul %109, %9, %cst_44 {dimension_numbers = #tpu.dot_dimension_numbers<[1], [0], [0], [1], [0, 0, 1, 1], [], []>} : vector<16x128xbf16>, vector<128x64xbf16>, vector<16x64xf32> -> vector<16x64xf32>
    %111 = vector.broadcast %10 : vector<1x64xf32> to vector<16x64xf32>
    %112 = arith.addf %110, %111 : vector<16x64xf32>
    %cst_45 = arith.constant 0.000000e+00 : f32
    %113 = vector.broadcast %cst_45 : f32 to vector<16x64xf32>
    %114 = arith.maximumf %112, %113 : vector<16x64xf32>
    %115 = arith.truncf %114 : vector<16x64xf32> to vector<16x64xbf16>
    %cst_46 = arith.constant dense<0.000000e+00> : vector<16x17xf32>
    %116 = tpu.matmul %115, %11, %cst_46 {dimension_numbers = #tpu.dot_dimension_numbers<[1], [0], [0], [1], [0, 0, 1, 1], [], []>} : vector<16x64xbf16>, vector<64x17xbf16>, vector<16x17xf32> -> vector<16x17xf32>
    %117 = vector.broadcast %12 : vector<1x17xf32> to vector<16x17xf32>
    %118 = arith.addf %116, %117 : vector<16x17xf32>
    %119 = vector.extract_strided_slice %118 {offsets = [0, 0], sizes = [16, 16], strides = [1, 1]} : vector<16x17xf32> to vector<16x16xf32>
    %120 = vector.extract_strided_slice %118 {offsets = [0, 16], sizes = [16, 1], strides = [1, 1]} : vector<16x17xf32> to vector<16x1xf32>
    %cst_47 = arith.constant 0.000000e+00 : f32
    %121 = vector.broadcast %cst_47 : f32 to vector<16x26xf32>
    %122 = tpu.concatenate %29, %47, %65, %83, %101, %119, %30, %48, %66, %84, %102, %120, %121 in 1 : vector<16x16xf32>, vector<16x16xf32>, vector<16x16xf32>, vector<16x16xf32>, vector<16x16xf32>, vector<16x16xf32>, vector<16x1xf32>, vector<16x1xf32>, vector<16x1xf32>, vector<16x1xf32>, vector<16x1xf32>, vector<16x1xf32>, vector<16x26xf32> -> vector<16x128xf32>
    %c0_48 = arith.constant 0 : index
    %c0_49 = arith.constant 0 : index
    %123 = vector.load %arg10[%c0_48, %c0_49] : memref<16x128xf32, #tpu.memory_space<vmem>>, vector<16x128xf32>
    tpu.vector_store %arg10[%c0_48, %c0_49], %122 {strides = array<i32>} : memref<16x128xf32, #tpu.memory_space<vmem>>, vector<16x128xf32>,
    return
  }
  func.func @transform_0(%arg0: i32) -> (i32, i32) {
    %c0_i32 = arith.constant 0 : i32
    %c0_i32_0 = arith.constant 0 : i32
    return %arg0, %c0_i32 : i32, i32
  }
  func.func @transform_1(%arg0: i32) -> (i32, i32) {
    %c0_i32 = arith.constant 0 : i32
    %c0_i32_0 = arith.constant 0 : i32
    %c0_i32_1 = arith.constant 0 : i32
    return %c0_i32, %c0_i32_0 : i32, i32
  }
  func.func @transform_2(%arg0: i32) -> (i32, i32) {
    %c0_i32 = arith.constant 0 : i32
    %c0_i32_0 = arith.constant 0 : i32
    %c0_i32_1 = arith.constant 0 : i32
    return %c0_i32, %c0_i32_0 : i32, i32
  }
  func.func @transform_3(%arg0: i32) -> (i32, i32) {
    %c0_i32 = arith.constant 0 : i32
    %c0_i32_0 = arith.constant 0 : i32
    %c0_i32_1 = arith.constant 0 : i32
    return %c0_i32, %c0_i32_0 : i32, i32
  }
  func.func @transform_4(%arg0: i32) -> (i32, i32) {
    %c0_i32 = arith.constant 0 : i32
    %c0_i32_0 = arith.constant 0 : i32
    %c0_i32_1 = arith.constant 0 : i32
    return %c0_i32, %c0_i32_0 : i32, i32
  }
  func.func @transform_5(%arg0: i32) -> (i32, i32) {
    %c0_i32 = arith.constant 0 : i32
    %c0_i32_0 = arith.constant 0 : i32
    %c0_i32_1 = arith.constant 0 : i32
    return %c0_i32, %c0_i32_0 : i32, i32
  }
  func.func @transform_6(%arg0: i32) -> (i32, i32) {
    %c0_i32 = arith.constant 0 : i32
    %c0_i32_0 = arith.constant 0 : i32
    %c0_i32_1 = arith.constant 0 : i32
    return %c0_i32, %c0_i32_0 : i32, i32
  }
  func.func @transform_7(%arg0: i32) -> (i32, i32) {
    %c0_i32 = arith.constant 0 : i32
    %c0_i32_0 = arith.constant 0 : i32
    %c0_i32_1 = arith.constant 0 : i32
    return %c0_i32, %c0_i32_0 : i32, i32
  }
  func.func @transform_8(%arg0: i32) -> (i32, i32) {
    %c0_i32 = arith.constant 0 : i32
    %c0_i32_0 = arith.constant 0 : i32
    %c0_i32_1 = arith.constant 0 : i32
    return %c0_i32, %c0_i32_0 : i32, i32
  }
  func.func @transform_9(%arg0: i32) -> (i32, i32) {
    %c0_i32 = arith.constant 0 : i32
    %c0_i32_0 = arith.constant 0 : i32
    return %arg0, %c0_i32 : i32, i32
  }
}

</mosaic_0001>

<llo_original>
// kernel: tpu_custom_call.1
$region0: #{tpu_custom_call.1}
  #allocation0 [shape = 'u32[]', space=smem, size = 0x4, offset = 0x4, fixed_abs, tag = 'smem constant byte address 0x4 - core index']
  #allocation1 [shape = 'u32[144,128]{1,0:T(1,128)}', space=vmem, size = 0x12000, scoped, tag = 'internal scratch']
  %s0 = inlined_call_operand.vmem [shape: bf16[16,32], index: 0, kind: input, shape index: {}]
  %s1 = inlined_call_operand.vmem [shape: bf16[32,192], index: 1, kind: input, shape index: {}]
  %s2 = inlined_call_operand.vmem [shape: f32[1,192], index: 2, kind: input, shape index: {}]
  %s3 = inlined_call_operand.vmem [shape: bf16[32,128], index: 3, kind: input, shape index: {}]
  %s4 = inlined_call_operand.vmem [shape: f32[1,128], index: 4, kind: input, shape index: {}]
  %s5 = inlined_call_operand.vmem [shape: bf16[128,64], index: 5, kind: input, shape index: {}]
  %s6 = inlined_call_operand.vmem [shape: f32[1,64], index: 6, kind: input, shape index: {}]
  %s7 = inlined_call_operand.vmem [shape: bf16[64,17], index: 7, kind: input, shape index: {}]
  %s8 = inlined_call_operand.vmem [shape: f32[1,17], index: 8, kind: input, shape index: {}]
  %s9 = inlined_call_operand.hbm [shape: f32[16,128], index: 9, kind: output, shape index: {}]
  %s10 = sld [smem:[#allocation0]]
  $region46: #{tpu_custom_call.1} parent=0
    _
  %s12 = ssub.s32 1, %s10
  %s13 = scalar_select 0, %s12, %s10
  $region1: #{tpu_custom_call.1} parent=0
    #allocation2 [shape = 'u8[8192]{0}', space=vmem, size = 0x2000, scoped, tag = 'output window, operand 0, single buffered']
    #allocation3 [shape = 's32[1]{0}', space=sflag, size = 0x4, scoped, tag = 'scoped memory for tpu_custom_call.1']
    %14 = vsyncpa [#allocation3], 0
    // Predicated region
    $region2: #{tpu_custom_call.1} parent=1 // pred_check
      _
    $region3: #{tpu_custom_call.1} parent=1 // pred_check_branch
      %16 = sbr.rel (0) target = $region5
    $region4: #{tpu_custom_call.1} parent=1 // pred_region
      _
    $region5: #{tpu_custom_call.1} parent=1 // pred_fallthru
      _
    // Predicated region
    $region6: #{tpu_custom_call.1} parent=1 // pred_check
      _
    $region7: #{tpu_custom_call.1} parent=1 // pred_check_branch
      %18 = sbr.rel (0) target = $region9
    $region8: #{tpu_custom_call.1} parent=1 // pred_region
      _
    $region9: #{tpu_custom_call.1} parent=1 // pred_fallthru
      _
    // Predicated region
    $region10: #{tpu_custom_call.1} parent=1 // pred_check
      _
    $region11: #{tpu_custom_call.1} parent=1 // pred_check_branch
      %20 = sbr.rel (0) target = $region13
    $region12: #{tpu_custom_call.1} parent=1 // pred_region
      _
    $region13: #{tpu_custom_call.1} parent=1 // pred_fallthru
      _
    // Predicated region
    $region14: #{tpu_custom_call.1} parent=1 // pred_check
      _
    $region15: #{tpu_custom_call.1} parent=1 // pred_check_branch
      %22 = sbr.rel (0) target = $region17
    $region16: #{tpu_custom_call.1} parent=1 // pred_region
      _
    $region17: #{tpu_custom_call.1} parent=1 // pred_fallthru
      _
    // Predicated region
    $region18: #{tpu_custom_call.1} parent=1 // pred_check
      _
    $region19: #{tpu_custom_call.1} parent=1 // pred_check_branch
      %24 = sbr.rel (0) target = $region21
    $region20: #{tpu_custom_call.1} parent=1 // pred_region
      _
    $region21: #{tpu_custom_call.1} parent=1 // pred_fallthru
      _
    // Predicated region
    $region22: #{tpu_custom_call.1} parent=1 // pred_check
      _
    $region23: #{tpu_custom_call.1} parent=1 // pred_check_branch
      %26 = sbr.rel (0) target = $region25
    $region24: #{tpu_custom_call.1} parent=1 // pred_region
      _
    $region25: #{tpu_custom_call.1} parent=1 // pred_fallthru
      _
    // Predicated region
    $region26: #{tpu_custom_call.1} parent=1 // pred_check
      _
    $region27: #{tpu_custom_call.1} parent=1 // pred_check_branch
      %28 = sbr.rel (0) target = $region29
    $region28: #{tpu_custom_call.1} parent=1 // pred_region
      _
    $region29: #{tpu_custom_call.1} parent=1 // pred_fallthru
      _
    // Predicated region
    $region30: #{tpu_custom_call.1} parent=1 // pred_check
      _
    $region31: #{tpu_custom_call.1} parent=1 // pred_check_branch
      %30 = sbr.rel (0) target = $region33
    $region32: #{tpu_custom_call.1} parent=1 // pred_region
      _
    $region33: #{tpu_custom_call.1} parent=1 // pred_fallthru
      _
    // Predicated region
    $region34: #{tpu_custom_call.1} parent=1 // pred_check
      _
    $region35: #{tpu_custom_call.1} parent=1 // pred_check_branch
      %32 = sbr.rel (0) target = $region37
    $region36: #{tpu_custom_call.1} parent=1 // pred_region
      _
    $region37: #{tpu_custom_call.1} parent=1 // pred_fallthru
      _
    %v34 = vld [vmem:[%s0] sm:$0xf]
    %v35 = vld [vmem:[%s0 + $0x4] sm:$0xf]
    %v36 = vld [vmem:[%s1] sm:$0xff]
    %v37 = vld [vmem:[%s1 + $0x8] sm:$0xff]
    %v38 = vld [vmem:[%s1 + $0x10] sm:$0xff]
    %v39 = vld [vmem:[%s1 + $0x18] sm:$0xff]
    %v40 = vld [vmem:[%s2] sm:$0x3]
    %v42 = vlaneseq
    %v43 = vshrl.u32 %v42, 7
    %v44 = vsub.s32 0, %v43
    %v45 = vrot.slane %v40, %v44
    %v46 = vlaneseq
    %v47 = vshrl.u32 %v46, 7
    %v48 = vsub.s32 1, %v47
    %v49 = vrot.slane %v40, %v48
    %v54 = vunpack.c.l.b16 %v34
    %v55 = vunpack.c.l.b16 %v35
    %v56 = vpack.c.b16 %v55, %v54
    %v61 = vunpack.c.l.b16 %v36
    %v62 = vunpack.c.h.b16 %v36
    %v63 = vunpack.c.l.b16 %v37
    %v64 = vunpack.c.h.b16 %v37
    %v65 = vunpack.c.l.b16 %v38
    %v66 = vunpack.c.h.b16 %v38
    %v67 = vunpack.c.l.b16 %v39
    %v68 = vunpack.c.h.b16 %v39
    %v69 = vpack.c.b16 %v63, %v61
    %v70 = vpack.c.b16 %v64, %v62
    %v71 = vpack.c.b16 %v67, %v65
    %v72 = vpack.c.b16 %v68, %v66
    %vm77 = vcmask 261120
    %v79 = vsel %vm77, %v56, 0
    %81 = vmatprep.subr.bf16.mxu0 0
    %82 = vmatpush1.bf16.msra.mxu0 0
    %83 = vmatprep.subr.bf16.mxu0 0
    %84 = vmatpush1.bf16.msra.mxu0 0
    %85 = vmatprep.subr.bf16.mxu0 0
    %86 = vmatpush1.bf16.msra.mxu0 0
    %87 = vmatprep.subr.bf16.mxu0 0
    %88 = vmatpush1.bf16.msra.mxu0 0
    %89 = vmatprep.subr.bf16.mxu0 0
    %90 = vmatpush1.bf16.msra.mxu0 0
    %91 = vmatprep.subr.bf16.mxu0 0
    %92 = vmatpush1.bf16.msra.mxu0 0
    %93 = vmatprep.subr.bf16.mxu0 %v72
    %94 = vmatpush1.bf16.msra.mxu0 %v71
    %95 = vmatprep.subr.bf16.mxu0 %v70
    %96 = vmatpush1.bf16.msra.mxu0 %v69
    %97 = vmatprep.subr.bf16.mxu0 0
    %98 = vmatpush2.bf16.msra.mxu0 0
    %99 = vmatprep.subr.bf16.mxu0 0
    %100 = vmatpush2.bf16.msra.mxu0 0
    %101 = vmatprep.subr.bf16.mxu0 0
    %102 = vmatpush2.bf16.msra.mxu0 0
    %103 = vmatprep.subr.bf16.mxu0 0
    %104 = vmatpush2.bf16.msra.mxu0 0
    %105 = vmatprep.subr.bf16.mxu0 0
    %106 = vmatpush2.bf16.msra.mxu0 0
    %107 = vmatprep.subr.bf16.mxu0 0
    %108 = vmatpush2.bf16.msra.mxu0 0
    %109 = vmatprep.subr.bf16.mxu0 0
    %110 = vmatpush2.bf16.msra.mxu0 0
    %111 = vmatprep.subr.bf16.mxu0 0
    %112 = vmatpush2.bf16.msra.mxu0 0
    %113 = vmatprep.mubr.bf16.mxu0 0
    %114 = vmatmul.mubr.bf16.gmra.mxu0 %v79
    %v115 = vpop.f32.mrf.mxu0
    %v116 = vadd.f32 %v45, %v115
    %v117 = vpop.f32.mrf.mxu0
    %v118 = vadd.f32 %v49, %v117
    %v119 = vpop.f32.mrf.mxu0
    %v120 = vadd.f32 %v45, %v119
    %v121 = vpop.f32.mrf.mxu0
    %v122 = vadd.f32 %v49, %v121
    %123 = vdwg.mxu0
    %v124 = vpack.c.bf16 %v120, %v116
    %v125 = vpack.c.bf16 %v122, %v118
    %v126 = vld [vmem:[%s3] sm:$0xf]
    %v127 = vld [vmem:[%s3 + $0x4] sm:$0xf]
    %v128 = vld [vmem:[%s3 + $0x8] sm:$0xf]
    %v129 = vld [vmem:[%s3 + $0xc] sm:$0xf]
    %v130 = vld [vmem:[%s4] sm:$0x1]
    %v131 = vld [vmem:[%s5] sm:$0xf]
    %v132 = vld [vmem:[%s5 + $0x4] sm:$0xf]
    %v133 = vld [vmem:[%s5 + $0x8] sm:$0xf]
    %v134 = vld [vmem:[%s5 + $0xc] sm:$0xf]
    %v135 = vld [vmem:[%s5 + $0x10] sm:$0xf]
    %v136 = vld [vmem:[%s5 + $0x14] sm:$0xf]
    %v137 = vld [vmem:[%s5 + $0x18] sm:$0xf]
    %v138 = vld [vmem:[%s5 + $0x1c] sm:$0xf]
    %v139 = vld [vmem:[%s5 + $0x20] sm:$0xf]
    %v140 = vld [vmem:[%s5 + $0x24] sm:$0xf]
    %v141 = vld [vmem:[%s5 + $0x28] sm:$0xf]
    %v142 = vld [vmem:[%s5 + $0x2c] sm:$0xf]
    %v143 = vld [vmem:[%s5 + $0x30] sm:$0xf]
    %v144 = vld [vmem:[%s5 + $0x34] sm:$0xf]
    %v145 = vld [vmem:[%s5 + $0x38] sm:$0xf]
    %v146 = vld [vmem:[%s5 + $0x3c] sm:$0xf]
    %v147 = vld [vmem:[%s6] sm:$0x1]
    %v148 = vld [vmem:[%s7] sm:$0xf]
    %v149 = vld [vmem:[%s7 + $0x4] sm:$0xf]
    %v150 = vld [vmem:[%s7 + $0x8] sm:$0xf]
    %v151 = vld [vmem:[%s7 + $0xc] sm:$0xf]
    %v152 = vld [vmem:[%s7 + $0x10] sm:$0xf]
    %v153 = vld [vmem:[%s7 + $0x14] sm:$0xf]
    %v154 = vld [vmem:[%s7 + $0x18] sm:$0xf]
    %v155 = vld [vmem:[%s7 + $0x1c] sm:$0xf]
    %v156 = vld [vmem:[%s8] sm:$0x1]
    %v158 = vlaneseq
    %v159 = vshrl.u32 %v158, 7
    %v160 = vsub.s32 0, %v159
    %v161 = vrot.slane %v130, %v160
    %v167 = vunpack.c.l.b16 %v126
    %v168 = vunpack.c.l.b16 %v127
    %v169 = vunpack.c.l.b16 %v128
    %v170 = vunpack.c.l.b16 %v129
    %v171 = vpack.c.b16 %v168, %v167
    %v172 = vpack.c.b16 %v170, %v169
    %v176 = vsel %vm77, %v124, 0
    %178 = vmatprep.subr.bf16.mxu0 0
    %179 = vmatpush1.bf16.msra.mxu0 0
    %180 = vmatprep.subr.bf16.mxu0 0
    %181 = vmatpush1.bf16.msra.mxu0 0
    %182 = vmatprep.subr.bf16.mxu0 0
    %183 = vmatpush1.bf16.msra.mxu0 0
    %184 = vmatprep.subr.bf16.mxu0 0
    %185 = vmatpush1.bf16.msra.mxu0 0
    %186 = vmatprep.subr.bf16.mxu0 0
    %187 = vmatpush1.bf16.msra.mxu0 0
    %188 = vmatprep.subr.bf16.mxu0 0
    %189 = vmatpush1.bf16.msra.mxu0 0
    %190 = vmatprep.subr.bf16.mxu0 0
    %191 = vmatpush1.bf16.msra.mxu0 %v172
    %192 = vmatprep.subr.bf16.mxu0 0
    %193 = vmatpush1.bf16.msra.mxu0 %v171
    %194 = vmatprep.subr.bf16.mxu0 0
    %195 = vmatpush2.bf16.msra.mxu0 0
    %196 = vmatprep.subr.bf16.mxu0 0
    %197 = vmatpush2.bf16.msra.mxu0 0
    %198 = vmatprep.subr.bf16.mxu0 0
    %199 = vmatpush2.bf16.msra.mxu0 0
    %200 = vmatprep.subr.bf16.mxu0 0
    %201 = vmatpush2.bf16.msra.mxu0 0
    %202 = vmatprep.subr.bf16.mxu0 0
    %203 = vmatpush2.bf16.msra.mxu0 0
    %204 = vmatprep.subr.bf16.mxu0 0
    %205 = vmatpush2.bf16.msra.mxu0 0
    %206 = vmatprep.subr.bf16.mxu0 0
    %207 = vmatpush2.bf16.msra.mxu0 0
    %208 = vmatprep.subr.bf16.mxu0 0
    %209 = vmatpush2.bf16.msra.mxu0 0
    %210 = vmatprep.mubr.bf16.mxu0 0
    %211 = vmatmul.mubr.bf16.gmra.mxu0 %v176
    %v212 = vpop.f32.mrf.mxu0
    %v213 = vadd.f32 %v161, %v212
    %v214 = vpop.f32.mrf.mxu0
    %v215 = vpop.f32.mrf.mxu0
    %v216 = vadd.f32 %v161, %v215
    %v217 = vpop.f32.mrf.mxu0
    %218 = vdwg.mxu0
    %v219 = vmax.f32 %v213, 0.0
    %v220 = vmax.f32 %v216, 0.0
    %v221 = vpack.c.bf16 %v220, %v219
    %v223 = vlaneseq
    %v224 = vshrl.u32 %v223, 7
    %v225 = vsub.s32 0, %v224
    %v226 = vrot.slane %v147, %v225
    %v244 = vunpack.c.l.b16 %v131
    %v245 = vunpack.c.l.b16 %v132
    %v246 = vunpack.c.l.b16 %v133
    %v247 = vunpack.c.l.b16 %v134
    %v248 = vunpack.c.l.b16 %v135
    %v249 = vunpack.c.l.b16 %v136
    %v250 = vunpack.c.l.b16 %v137
    %v251 = vunpack.c.l.b16 %v138
    %v252 = vunpack.c.l.b16 %v139
    %v253 = vunpack.c.l.b16 %v140
    %v254 = vunpack.c.l.b16 %v141
    %v255 = vunpack.c.l.b16 %v142
    %v256 = vunpack.c.l.b16 %v143
    %v257 = vunpack.c.l.b16 %v144
    %v258 = vunpack.c.l.b16 %v145
    %v259 = vunpack.c.l.b16 %v146
    %v260 = vpack.c.b16 %v245, %v244
    %v261 = vpack.c.b16 %v247, %v246
    %v262 = vpack.c.b16 %v249, %v248
    %v263 = vpack.c.b16 %v251, %v250
    %v264 = vpack.c.b16 %v253, %v252
    %v265 = vpack.c.b16 %v255, %v254
    %v266 = vpack.c.b16 %v257, %v256
    %v267 = vpack.c.b16 %v259, %v258
    %276 = vmatprep.subr.bf16.mxu0 0
    %277 = vmatpush1.bf16.msra.mxu0 %v267
    %278 = vmatprep.subr.bf16.mxu0 0
    %279 = vmatpush1.bf16.msra.mxu0 %v266
    %280 = vmatprep.subr.bf16.mxu0 0
    %281 = vmatpush1.bf16.msra.mxu0 %v265
    %282 = vmatprep.subr.bf16.mxu0 0
    %283 = vmatpush1.bf16.msra.mxu0 %v264
    %284 = vmatprep.subr.bf16.mxu0 0
    %285 = vmatpush1.bf16.msra.mxu0 %v263
    %286 = vmatprep.subr.bf16.mxu0 0
    %287 = vmatpush1.bf16.msra.mxu0 %v262
    %288 = vmatprep.subr.bf16.mxu0 0
    %289 = vmatpush1.bf16.msra.mxu0 %v261
    %290 = vmatprep.subr.bf16.mxu0 0
    %291 = vmatpush1.bf16.msra.mxu0 %v260
    %292 = vmatprep.subr.bf16.mxu0 0
    %293 = vmatpush2.bf16.msra.mxu0 0
    %294 = vmatprep.subr.bf16.mxu0 0
    %295 = vmatpush2.bf16.msra.mxu0 0
    %296 = vmatprep.subr.bf16.mxu0 0
    %297 = vmatpush2.bf16.msra.mxu0 0
    %298 = vmatprep.subr.bf16.mxu0 0
    %299 = vmatpush2.bf16.msra.mxu0 0
    %300 = vmatprep.subr.bf16.mxu0 0
    %301 = vmatpush2.bf16.msra.mxu0 0
    %302 = vmatprep.subr.bf16.mxu0 0
    %303 = vmatpush2.bf16.msra.mxu0 0
    %304 = vmatprep.subr.bf16.mxu0 0
    %305 = vmatpush2.bf16.msra.mxu0 0
    %306 = vmatprep.subr.bf16.mxu0 0
    %307 = vmatpush2.bf16.msra.mxu0 0
    %308 = vmatprep.mubr.bf16.mxu0 0
    %309 = vmatmul.mubr.bf16.gmra.mxu0 %v221
    %v310 = vpop.f32.mrf.mxu0
    %v311 = vadd.f32 %v226, %v310
    %v312 = vpop.f32.mrf.mxu0
    %v313 = vpop.f32.mrf.mxu0
    %v314 = vadd.f32 %v226, %v313
    %v315 = vpop.f32.mrf.mxu0
    %316 = vdwg.mxu0
    %v317 = vmax.f32 %v311, 0.0
    %v318 = vmax.f32 %v314, 0.0
    %v319 = vpack.c.bf16 %v318, %v317
    %v321 = vlaneseq
    %v322 = vshrl.u32 %v321, 7
    %v323 = vsub.s32 0, %v322
    %v324 = vrot.slane %v156, %v323
    %v334 = vunpack.c.l.b16 %v148
    %v335 = vunpack.c.l.b16 %v149
    %v336 = vunpack.c.l.b16 %v150
    %v337 = vunpack.c.l.b16 %v151
    %v338 = vunpack.c.l.b16 %v152
    %v339 = vunpack.c.l.b16 %v153
    %v340 = vunpack.c.l.b16 %v154
    %v341 = vunpack.c.l.b16 %v155
    %v342 = vpack.c.b16 %v335, %v334
    %v343 = vpack.c.b16 %v337, %v336
    %v344 = vpack.c.b16 %v339, %v338
    %v345 = vpack.c.b16 %v341, %v340
    %vm350 = vcmask 523264
    %v352 = vsel %vm350, %v319, 0
    %354 = vmatprep.subr.bf16.mxu0 0
    %355 = vmatpush1.bf16.msra.mxu0 0
    %356 = vmatprep.subr.bf16.mxu0 0
    %357 = vmatpush1.bf16.msra.mxu0 0
    %358 = vmatprep.subr.bf16.mxu0 0
    %359 = vmatpush1.bf16.msra.mxu0 0
    %360 = vmatprep.subr.bf16.mxu0 0
    %361 = vmatpush1.bf16.msra.mxu0 0
    %362 = vmatprep.subr.bf16.mxu0 0
    %363 = vmatpush1.bf16.msra.mxu0 %v345
    %364 = vmatprep.subr.bf16.mxu0 0
    %365 = vmatpush1.bf16.msra.mxu0 %v344
    %366 = vmatprep.subr.bf16.mxu0 0
    %367 = vmatpush1.bf16.msra.mxu0 %v343
    %368 = vmatprep.subr.bf16.mxu0 0
    %369 = vmatpush1.bf16.msra.mxu0 %v342
    %370 = vmatprep.subr.bf16.mxu0 0
    %371 = vmatpush2.bf16.msra.mxu0 0
    %372 = vmatprep.subr.bf16.mxu0 0
    %373 = vmatpush2.bf16.msra.mxu0 0
    %374 = vmatprep.subr.bf16.mxu0 0
    %375 = vmatpush2.bf16.msra.mxu0 0
    %376 = vmatprep.subr.bf16.mxu0 0
    %377 = vmatpush2.bf16.msra.mxu0 0
    %378 = vmatprep.subr.bf16.mxu0 0
    %379 = vmatpush2.bf16.msra.mxu0 0
    %380 = vmatprep.subr.bf16.mxu0 0
    %381 = vmatpush2.bf16.msra.mxu0 0
    %382 = vmatprep.subr.bf16.mxu0 0
    %383 = vmatpush2.bf16.msra.mxu0 0
    %384 = vmatprep.subr.bf16.mxu0 0
    %385 = vmatpush2.bf16.msra.mxu0 0
    %386 = vmatprep.mubr.bf16.mxu0 0
    %387 = vmatmul.mubr.bf16.gmra.mxu0 %v352
    %v388 = vpop.f32.mrf.mxu0
    %v389 = vadd.f32 %v324, %v388
    %v390 = vpop.f32.mrf.mxu0
    %v391 = vpop.f32.mrf.mxu0
    %v392 = vadd.f32 %v324, %v391
    %v393 = vpop.f32.mrf.mxu0
    %394 = vdwg.mxu0
    %396 = vrot.lane.b32.xlu0 %v124, 96
    %v397 = vpop.permute.xlu0 %396
    %v399 = vsel %vm77, %v397, 0
    %401 = vmatprep.subr.bf16.mxu0 0
    %402 = vmatpush1.bf16.msra.mxu0 0
    %403 = vmatprep.subr.bf16.mxu0 0
    %404 = vmatpush1.bf16.msra.mxu0 0
    %405 = vmatprep.subr.bf16.mxu0 0
    %406 = vmatpush1.bf16.msra.mxu0 0
    %407 = vmatprep.subr.bf16.mxu0 0
    %408 = vmatpush1.bf16.msra.mxu0 0
    %409 = vmatprep.subr.bf16.mxu0 0
    %410 = vmatpush1.bf16.msra.mxu0 0
    %411 = vmatprep.subr.bf16.mxu0 0
    %412 = vmatpush1.bf16.msra.mxu0 0
    %413 = vmatprep.subr.bf16.mxu0 0
    %414 = vmatpush1.bf16.msra.mxu0 %v172
    %415 = vmatprep.subr.bf16.mxu0 0
    %416 = vmatpush1.bf16.msra.mxu0 %v171
    %417 = vmatprep.subr.bf16.mxu0 0
    %418 = vmatpush2.bf16.msra.mxu0 0
    %419 = vmatprep.subr.bf16.mxu0 0
    %420 = vmatpush2.bf16.msra.mxu0 0
    %421 = vmatprep.subr.bf16.mxu0 0
    %422 = vmatpush2.bf16.msra.mxu0 0
    %423 = vmatprep.subr.bf16.mxu0 0
    %424 = vmatpush2.bf16.msra.mxu0 0
    %425 = vmatprep.subr.bf16.mxu0 0
    %426 = vmatpush2.bf16.msra.mxu0 0
    %427 = vmatprep.subr.bf16.mxu0 0
    %428 = vmatpush2.bf16.msra.mxu0 0
    %429 = vmatprep.subr.bf16.mxu0 0
    %430 = vmatpush2.bf16.msra.mxu0 0
    %431 = vmatprep.subr.bf16.mxu0 0
    %432 = vmatpush2.bf16.msra.mxu0 0
    %433 = vmatprep.mubr.bf16.mxu0 0
    %434 = vmatmul.mubr.bf16.gmra.mxu0 %v399
    %v435 = vpop.f32.mrf.mxu0
    %v436 = vadd.f32 %v161, %v435
    %v437 = vpop.f32.mrf.mxu0
    %v438 = vpop.f32.mrf.mxu0
    %v439 = vadd.f32 %v161, %v438
    %v440 = vpop.f32.mrf.mxu0
    %441 = vdwg.mxu0
    %v442 = vmax.f32 %v436, 0.0
    %v443 = vmax.f32 %v439, 0.0
    %v444 = vpack.c.bf16 %v443, %v442
    %445 = vmatprep.subr.bf16.mxu0 0
    %446 = vmatpush1.bf16.msra.mxu0 %v267
    %447 = vmatprep.subr.bf16.mxu0 0
    %448 = vmatpush1.bf16.msra.mxu0 %v266
    %449 = vmatprep.subr.bf16.mxu0 0
    %450 = vmatpush1.bf16.msra.mxu0 %v265
    %451 = vmatprep.subr.bf16.mxu0 0
    %452 = vmatpush1.bf16.msra.mxu0 %v264
    %453 = vmatprep.subr.bf16.mxu0 0
    %454 = vmatpush1.bf16.msra.mxu0 %v263
    %455 = vmatprep.subr.bf16.mxu0 0
    %456 = vmatpush1.bf16.msra.mxu0 %v262
    %457 = vmatprep.subr.bf16.mxu0 0
    %458 = vmatpush1.bf16.msra.mxu0 %v261
    %459 = vmatprep.subr.bf16.mxu0 0
    %460 = vmatpush1.bf16.msra.mxu0 %v260
    %461 = vmatprep.subr.bf16.mxu0 0
    %462 = vmatpush2.bf16.msra.mxu0 0
    %463 = vmatprep.subr.bf16.mxu0 0
    %464 = vmatpush2.bf16.msra.mxu0 0
    %465 = vmatprep.subr.bf16.mxu0 0
    %466 = vmatpush2.bf16.msra.mxu0 0
    %467 = vmatprep.subr.bf16.mxu0 0
    %468 = vmatpush2.bf16.msra.mxu0 0
    %469 = vmatprep.subr.bf16.mxu0 0
    %470 = vmatpush2.bf16.msra.mxu0 0
    %471 = vmatprep.subr.bf16.mxu0 0
    %472 = vmatpush2.bf16.msra.mxu0 0
    %473 = vmatprep.subr.bf16.mxu0 0
    %474 = vmatpush2.bf16.msra.mxu0 0
    %475 = vmatprep.subr.bf16.mxu0 0
    %476 = vmatpush2.bf16.msra.mxu0 0
    %477 = vmatprep.mubr.bf16.mxu0 0
    %478 = vmatmul.mubr.bf16.gmra.mxu0 %v444
    %v479 = vpop.f32.mrf.mxu0
    %v480 = vadd.f32 %v226, %v479
    %v481 = vpop.f32.mrf.mxu0
    %v482 = vpop.f32.mrf.mxu0
    %v483 = vadd.f32 %v226, %v482
    %v484 = vpop.f32.mrf.mxu0
    %485 = vdwg.mxu0
    %v486 = vmax.f32 %v480, 0.0
    %v487 = vmax.f32 %v483, 0.0
    %v488 = vpack.c.bf16 %v487, %v486
    %v490 = vsel %vm350, %v488, 0
    %492 = vmatprep.subr.bf16.mxu0 0
    %493 = vmatpush1.bf16.msra.mxu0 0
    %494 = vmatprep.subr.bf16.mxu0 0
    %495 = vmatpush1.bf16.msra.mxu0 0
    %496 = vmatprep.subr.bf16.mxu0 0
    %497 = vmatpush1.bf16.msra.mxu0 0
    %498 = vmatprep.subr.bf16.mxu0 0
    %499 = vmatpush1.bf16.msra.mxu0 0
    %500 = vmatprep.subr.bf16.mxu0 0
    %501 = vmatpush1.bf16.msra.mxu0 %v345
    %502 = vmatprep.subr.bf16.mxu0 0
    %503 = vmatpush1.bf16.msra.mxu0 %v344
    %504 = vmatprep.subr.bf16.mxu0 0
    %505 = vmatpush1.bf16.msra.mxu0 %v343
    %506 = vmatprep.subr.bf16.mxu0 0
    %507 = vmatpush1.bf16.msra.mxu0 %v342
    %508 = vmatprep.subr.bf16.mxu0 0
    %509 = vmatpush2.bf16.msra.mxu0 0
    %510 = vmatprep.subr.bf16.mxu0 0
    %511 = vmatpush2.bf16.msra.mxu0 0
    %512 = vmatprep.subr.bf16.mxu0 0
    %513 = vmatpush2.bf16.msra.mxu0 0
    %514 = vmatprep.subr.bf16.mxu0 0
    %515 = vmatpush2.bf16.msra.mxu0 0
    %516 = vmatprep.subr.bf16.mxu0 0
    %517 = vmatpush2.bf16.msra.mxu0 0
    %518 = vmatprep.subr.bf16.mxu0 0
    %519 = vmatpush2.bf16.msra.mxu0 0
    %520 = vmatprep.subr.bf16.mxu0 0
    %521 = vmatpush2.bf16.msra.mxu0 0
    %522 = vmatprep.subr.bf16.mxu0 0
    %523 = vmatpush2.bf16.msra.mxu0 0
    %524 = vmatprep.mubr.bf16.mxu0 0
    %525 = vmatmul.mubr.bf16.gmra.mxu0 %v490
    %v526 = vpop.f32.mrf.mxu0
    %v527 = vadd.f32 %v324, %v526
    %v528 = vpop.f32.mrf.mxu0
    %v529 = vpop.f32.mrf.mxu0
    %v530 = vadd.f32 %v324, %v529
    %v531 = vpop.f32.mrf.mxu0
    %532 = vdwg.mxu0
    %533 = vrot.lane.b32.xlu0 %v124, 64
    %v534 = vpop.permute.xlu0 %533
    %v536 = vsel %vm77, %v534, 0
    %538 = vmatprep.subr.bf16.mxu0 0
    %539 = vmatpush1.bf16.msra.mxu0 0
    %540 = vmatprep.subr.bf16.mxu0 0
    %541 = vmatpush1.bf16.msra.mxu0 0
    %542 = vmatprep.subr.bf16.mxu0 0
    %543 = vmatpush1.bf16.msra.mxu0 0
    %544 = vmatprep.subr.bf16.mxu0 0
    %545 = vmatpush1.bf16.msra.mxu0 0
    %546 = vmatprep.subr.bf16.mxu0 0
    %547 = vmatpush1.bf16.msra.mxu0 0
    %548 = vmatprep.subr.bf16.mxu0 0
    %549 = vmatpush1.bf16.msra.mxu0 0
    %550 = vmatprep.subr.bf16.mxu0 0
    %551 = vmatpush1.bf16.msra.mxu0 %v172
    %552 = vmatprep.subr.bf16.mxu0 0
    %553 = vmatpush1.bf16.msra.mxu0 %v171
    %554 = vmatprep.subr.bf16.mxu0 0
    %555 = vmatpush2.bf16.msra.mxu0 0
    %556 = vmatprep.subr.bf16.mxu0 0
    %557 = vmatpush2.bf16.msra.mxu0 0
    %558 = vmatprep.subr.bf16.mxu0 0
    %559 = vmatpush2.bf16.msra.mxu0 0
    %560 = vmatprep.subr.bf16.mxu0 0
    %561 = vmatpush2.bf16.msra.mxu0 0
    %562 = vmatprep.subr.bf16.mxu0 0
    %563 = vmatpush2.bf16.msra.mxu0 0
    %564 = vmatprep.subr.bf16.mxu0 0
    %565 = vmatpush2.bf16.msra.mxu0 0
    %566 = vmatprep.subr.bf16.mxu0 0
    %567 = vmatpush2.bf16.msra.mxu0 0
    %568 = vmatprep.subr.bf16.mxu0 0
    %569 = vmatpush2.bf16.msra.mxu0 0
    %570 = vmatprep.mubr.bf16.mxu0 0
    %571 = vmatmul.mubr.bf16.gmra.mxu0 %v536
    %v572 = vpop.f32.mrf.mxu0
    %v573 = vadd.f32 %v161, %v572
    %v574 = vpop.f32.mrf.mxu0
    %v575 = vpop.f32.mrf.mxu0
    %v576 = vadd.f32 %v161, %v575
    %v577 = vpop.f32.mrf.mxu0
    %578 = vdwg.mxu0
    %v579 = vmax.f32 %v573, 0.0
    %v580 = vmax.f32 %v576, 0.0
    %v581 = vpack.c.bf16 %v580, %v579
    %582 = vmatprep.subr.bf16.mxu0 0
    %583 = vmatpush1.bf16.msra.mxu0 %v267
    %584 = vmatprep.subr.bf16.mxu0 0
    %585 = vmatpush1.bf16.msra.mxu0 %v266
    %586 = vmatprep.subr.bf16.mxu0 0
    %587 = vmatpush1.bf16.msra.mxu0 %v265
    %588 = vmatprep.subr.bf16.mxu0 0
    %589 = vmatpush1.bf16.msra.mxu0 %v264
    %590 = vmatprep.subr.bf16.mxu0 0
    %591 = vmatpush1.bf16.msra.mxu0 %v263
    %592 = vmatprep.subr.bf16.mxu0 0
    %593 = vmatpush1.bf16.msra.mxu0 %v262
    %594 = vmatprep.subr.bf16.mxu0 0
    %595 = vmatpush1.bf16.msra.mxu0 %v261
    %596 = vmatprep.subr.bf16.mxu0 0
    %597 = vmatpush1.bf16.msra.mxu0 %v260
    %598 = vmatprep.subr.bf16.mxu0 0
    %599 = vmatpush2.bf16.msra.mxu0 0
    %600 = vmatprep.subr.bf16.mxu0 0
    %601 = vmatpush2.bf16.msra.mxu0 0
    %602 = vmatprep.subr.bf16.mxu0 0
    %603 = vmatpush2.bf16.msra.mxu0 0
    %604 = vmatprep.subr.bf16.mxu0 0
    %605 = vmatpush2.bf16.msra.mxu0 0
    %606 = vmatprep.subr.bf16.mxu0 0
    %607 = vmatpush2.bf16.msra.mxu0 0
    %608 = vmatprep.subr.bf16.mxu0 0
    %609 = vmatpush2.bf16.msra.mxu0 0
    %610 = vmatprep.subr.bf16.mxu0 0
    %611 = vmatpush2.bf16.msra.mxu0 0
    %612 = vmatprep.subr.bf16.mxu0 0
    %613 = vmatpush2.bf16.msra.mxu0 0
    %614 = vmatprep.mubr.bf16.mxu0 0
    %615 = vmatmul.mubr.bf16.gmra.mxu0 %v581
    %v616 = vpop.f32.mrf.mxu0
    %v617 = vadd.f32 %v226, %v616
    %v618 = vpop.f32.mrf.mxu0
    %v619 = vpop.f32.mrf.mxu0
    %v620 = vadd.f32 %v226, %v619
    %v621 = vpop.f32.mrf.mxu0
    %622 = vdwg.mxu0
    %v623 = vmax.f32 %v617, 0.0
    %v624 = vmax.f32 %v620, 0.0
    %v625 = vpack.c.bf16 %v624, %v623
    %v627 = vsel %vm350, %v625, 0
    %629 = vmatprep.subr.bf16.mxu0 0
    %630 = vmatpush1.bf16.msra.mxu0 0
    %631 = vmatprep.subr.bf16.mxu0 0
    %632 = vmatpush1.bf16.msra.mxu0 0
    %633 = vmatprep.subr.bf16.mxu0 0
    %634 = vmatpush1.bf16.msra.mxu0 0
    %635 = vmatprep.subr.bf16.mxu0 0
    %636 = vmatpush1.bf16.msra.mxu0 0
    %637 = vmatprep.subr.bf16.mxu0 0
    %638 = vmatpush1.bf16.msra.mxu0 %v345
    %639 = vmatprep.subr.bf16.mxu0 0
    %640 = vmatpush1.bf16.msra.mxu0 %v344
    %641 = vmatprep.subr.bf16.mxu0 0
    %642 = vmatpush1.bf16.msra.mxu0 %v343
    %643 = vmatprep.subr.bf16.mxu0 0
    %644 = vmatpush1.bf16.msra.mxu0 %v342
    %645 = vmatprep.subr.bf16.mxu0 0
    %646 = vmatpush2.bf16.msra.mxu0 0
    %647 = vmatprep.subr.bf16.mxu0 0
    %648 = vmatpush2.bf16.msra.mxu0 0
    %649 = vmatprep.subr.bf16.mxu0 0
    %650 = vmatpush2.bf16.msra.mxu0 0
    %651 = vmatprep.subr.bf16.mxu0 0
    %652 = vmatpush2.bf16.msra.mxu0 0
    %653 = vmatprep.subr.bf16.mxu0 0
    %654 = vmatpush2.bf16.msra.mxu0 0
    %655 = vmatprep.subr.bf16.mxu0 0
    %656 = vmatpush2.bf16.msra.mxu0 0
    %657 = vmatprep.subr.bf16.mxu0 0
    %658 = vmatpush2.bf16.msra.mxu0 0
    %659 = vmatprep.subr.bf16.mxu0 0
    %660 = vmatpush2.bf16.msra.mxu0 0
    %661 = vmatprep.mubr.bf16.mxu0 0
    %662 = vmatmul.mubr.bf16.gmra.mxu0 %v627
    %v663 = vpop.f32.mrf.mxu0
    %v664 = vadd.f32 %v324, %v663
    %v665 = vpop.f32.mrf.mxu0
    %v666 = vpop.f32.mrf.mxu0
    %v667 = vadd.f32 %v324, %v666
    %v668 = vpop.f32.mrf.mxu0
    %669 = vdwg.mxu0
    %670 = vrot.lane.b32.xlu0 %v124, 32
    %v671 = vpop.permute.xlu0 %670
    %v673 = vsel %vm77, %v671, 0
    %675 = vmatprep.subr.bf16.mxu0 0
    %676 = vmatpush1.bf16.msra.mxu0 0
    %677 = vmatprep.subr.bf16.mxu0 0
    %678 = vmatpush1.bf16.msra.mxu0 0
    %679 = vmatprep.subr.bf16.mxu0 0
    %680 = vmatpush1.bf16.msra.mxu0 0
    %681 = vmatprep.subr.bf16.mxu0 0
    %682 = vmatpush1.bf16.msra.mxu0 0
    %683 = vmatprep.subr.bf16.mxu0 0
    %684 = vmatpush1.bf16.msra.mxu0 0
    %685 = vmatprep.subr.bf16.mxu0 0
    %686 = vmatpush1.bf16.msra.mxu0 0
    %687 = vmatprep.subr.bf16.mxu0 0
    %688 = vmatpush1.bf16.msra.mxu0 %v172
    %689 = vmatprep.subr.bf16.mxu0 0
    %690 = vmatpush1.bf16.msra.mxu0 %v171
    %691 = vmatprep.subr.bf16.mxu0 0
    %692 = vmatpush2.bf16.msra.mxu0 0
    %693 = vmatprep.subr.bf16.mxu0 0
    %694 = vmatpush2.bf16.msra.mxu0 0
    %695 = vmatprep.subr.bf16.mxu0 0
    %696 = vmatpush2.bf16.msra.mxu0 0
    %697 = vmatprep.subr.bf16.mxu0 0
    %698 = vmatpush2.bf16.msra.mxu0 0
    %699 = vmatprep.subr.bf16.mxu0 0
    %700 = vmatpush2.bf16.msra.mxu0 0
    %701 = vmatprep.subr.bf16.mxu0 0
    %702 = vmatpush2.bf16.msra.mxu0 0
    %703 = vmatprep.subr.bf16.mxu0 0
    %704 = vmatpush2.bf16.msra.mxu0 0
    %705 = vmatprep.subr.bf16.mxu0 0
    %706 = vmatpush2.bf16.msra.mxu0 0
    %707 = vmatprep.mubr.bf16.mxu0 0
    %708 = vmatmul.mubr.bf16.gmra.mxu0 %v673
    %v709 = vpop.f32.mrf.mxu0
    %v710 = vadd.f32 %v161, %v709
    %v711 = vpop.f32.mrf.mxu0
    %v712 = vpop.f32.mrf.mxu0
    %v713 = vadd.f32 %v161, %v712
    %v714 = vpop.f32.mrf.mxu0
    %715 = vdwg.mxu0
    %v716 = vmax.f32 %v710, 0.0
    %v717 = vmax.f32 %v713, 0.0
    %v718 = vpack.c.bf16 %v717, %v716
    %719 = vmatprep.subr.bf16.mxu0 0
    %720 = vmatpush1.bf16.msra.mxu0 %v267
    %721 = vmatprep.subr.bf16.mxu0 0
    %722 = vmatpush1.bf16.msra.mxu0 %v266
    %723 = vmatprep.subr.bf16.mxu0 0
    %724 = vmatpush1.bf16.msra.mxu0 %v265
    %725 = vmatprep.subr.bf16.mxu0 0
    %726 = vmatpush1.bf16.msra.mxu0 %v264
    %727 = vmatprep.subr.bf16.mxu0 0
    %728 = vmatpush1.bf16.msra.mxu0 %v263
    %729 = vmatprep.subr.bf16.mxu0 0
    %730 = vmatpush1.bf16.msra.mxu0 %v262
    %731 = vmatprep.subr.bf16.mxu0 0
    %732 = vmatpush1.bf16.msra.mxu0 %v261
    %733 = vmatprep.subr.bf16.mxu0 0
    %734 = vmatpush1.bf16.msra.mxu0 %v260
    %735 = vmatprep.subr.bf16.mxu0 0
    %736 = vmatpush2.bf16.msra.mxu0 0
    %737 = vmatprep.subr.bf16.mxu0 0
    %738 = vmatpush2.bf16.msra.mxu0 0
    %739 = vmatprep.subr.bf16.mxu0 0
    %740 = vmatpush2.bf16.msra.mxu0 0
    %741 = vmatprep.subr.bf16.mxu0 0
    %742 = vmatpush2.bf16.msra.mxu0 0
    %743 = vmatprep.subr.bf16.mxu0 0
    %744 = vmatpush2.bf16.msra.mxu0 0
    %745 = vmatprep.subr.bf16.mxu0 0
    %746 = vmatpush2.bf16.msra.mxu0 0
    %747 = vmatprep.subr.bf16.mxu0 0
    %748 = vmatpush2.bf16.msra.mxu0 0
    %749 = vmatprep.subr.bf16.mxu0 0
    %750 = vmatpush2.bf16.msra.mxu0 0
    %751 = vmatprep.mubr.bf16.mxu0 0
    %752 = vmatmul.mubr.bf16.gmra.mxu0 %v718
    %v753 = vpop.f32.mrf.mxu0
    %v754 = vadd.f32 %v226, %v753
    %v755 = vpop.f32.mrf.mxu0
    %v756 = vpop.f32.mrf.mxu0
    %v757 = vadd.f32 %v226, %v756
    %v758 = vpop.f32.mrf.mxu0
    %759 = vdwg.mxu0
    %v760 = vmax.f32 %v754, 0.0
    %v761 = vmax.f32 %v757, 0.0
    %v762 = vpack.c.bf16 %v761, %v760
    %v764 = vsel %vm350, %v762, 0
    %766 = vmatprep.subr.bf16.mxu0 0
    %767 = vmatpush1.bf16.msra.mxu0 0
    %768 = vmatprep.subr.bf16.mxu0 0
    %769 = vmatpush1.bf16.msra.mxu0 0
    %770 = vmatprep.subr.bf16.mxu0 0
    %771 = vmatpush1.bf16.msra.mxu0 0
    %772 = vmatprep.subr.bf16.mxu0 0
    %773 = vmatpush1.bf16.msra.mxu0 0
    %774 = vmatprep.subr.bf16.mxu0 0
    %775 = vmatpush1.bf16.msra.mxu0 %v345
    %776 = vmatprep.subr.bf16.mxu0 0
    %777 = vmatpush1.bf16.msra.mxu0 %v344
    %778 = vmatprep.subr.bf16.mxu0 0
    %779 = vmatpush1.bf16.msra.mxu0 %v343
    %780 = vmatprep.subr.bf16.mxu0 0
    %781 = vmatpush1.bf16.msra.mxu0 %v342
    %782 = vmatprep.subr.bf16.mxu0 0
    %783 = vmatpush2.bf16.msra.mxu0 0
    %784 = vmatprep.subr.bf16.mxu0 0
    %785 = vmatpush2.bf16.msra.mxu0 0
    %786 = vmatprep.subr.bf16.mxu0 0
    %787 = vmatpush2.bf16.msra.mxu0 0
    %788 = vmatprep.subr.bf16.mxu0 0
    %789 = vmatpush2.bf16.msra.mxu0 0
    %790 = vmatprep.subr.bf16.mxu0 0
    %791 = vmatpush2.bf16.msra.mxu0 0
    %792 = vmatprep.subr.bf16.mxu0 0
    %793 = vmatpush2.bf16.msra.mxu0 0
    %794 = vmatprep.subr.bf16.mxu0 0
    %795 = vmatpush2.bf16.msra.mxu0 0
    %796 = vmatprep.subr.bf16.mxu0 0
    %797 = vmatpush2.bf16.msra.mxu0 0
    %798 = vmatprep.mubr.bf16.mxu0 0
    %799 = vmatmul.mubr.bf16.gmra.mxu0 %v764
    %v800 = vpop.f32.mrf.mxu0
    %v801 = vadd.f32 %v324, %v800
    %v802 = vpop.f32.mrf.mxu0
    %v803 = vpop.f32.mrf.mxu0
    %v804 = vadd.f32 %v324, %v803
    %v805 = vpop.f32.mrf.mxu0
    %806 = vdwg.mxu0
    %v808 = vsel %vm77, %v125, 0
    %810 = vmatprep.subr.bf16.mxu0 0
    %811 = vmatpush1.bf16.msra.mxu0 0
    %812 = vmatprep.subr.bf16.mxu0 0
    %813 = vmatpush1.bf16.msra.mxu0 0
    %814 = vmatprep.subr.bf16.mxu0 0
    %815 = vmatpush1.bf16.msra.mxu0 0
    %816 = vmatprep.subr.bf16.mxu0 0
    %817 = vmatpush1.bf16.msra.mxu0 0
    %818 = vmatprep.subr.bf16.mxu0 0
    %819 = vmatpush1.bf16.msra.mxu0 0
    %820 = vmatprep.subr.bf16.mxu0 0
    %821 = vmatpush1.bf16.msra.mxu0 0
    %822 = vmatprep.subr.bf16.mxu0 0
    %823 = vmatpush1.bf16.msra.mxu0 %v172
    %824 = vmatprep.subr.bf16.mxu0 0
    %825 = vmatpush1.bf16.msra.mxu0 %v171
    %826 = vmatprep.subr.bf16.mxu0 0
    %827 = vmatpush2.bf16.msra.mxu0 0
    %828 = vmatprep.subr.bf16.mxu0 0
    %829 = vmatpush2.bf16.msra.mxu0 0
    %830 = vmatprep.subr.bf16.mxu0 0
    %831 = vmatpush2.bf16.msra.mxu0 0
    %832 = vmatprep.subr.bf16.mxu0 0
    %833 = vmatpush2.bf16.msra.mxu0 0
    %834 = vmatprep.subr.bf16.mxu0 0
    %835 = vmatpush2.bf16.msra.mxu0 0
    %836 = vmatprep.subr.bf16.mxu0 0
    %837 = vmatpush2.bf16.msra.mxu0 0
    %838 = vmatprep.subr.bf16.mxu0 0
    %839 = vmatpush2.bf16.msra.mxu0 0
    %840 = vmatprep.subr.bf16.mxu0 0
    %841 = vmatpush2.bf16.msra.mxu0 0
    %842 = vmatprep.mubr.bf16.mxu0 0
    %843 = vmatmul.mubr.bf16.gmra.mxu0 %v808
    %v844 = vpop.f32.mrf.mxu0
    %v845 = vadd.f32 %v161, %v844
    %v846 = vpop.f32.mrf.mxu0
    %v847 = vpop.f32.mrf.mxu0
    %v848 = vadd.f32 %v161, %v847
    %v849 = vpop.f32.mrf.mxu0
    %850 = vdwg.mxu0
    %v851 = vmax.f32 %v845, 0.0
    %v852 = vmax.f32 %v848, 0.0
    %v853 = vpack.c.bf16 %v852, %v851
    %854 = vmatprep.subr.bf16.mxu0 0
    %855 = vmatpush1.bf16.msra.mxu0 %v267
    %856 = vmatprep.subr.bf16.mxu0 0
    %857 = vmatpush1.bf16.msra.mxu0 %v266
    %858 = vmatprep.subr.bf16.mxu0 0
    %859 = vmatpush1.bf16.msra.mxu0 %v265
    %860 = vmatprep.subr.bf16.mxu0 0
    %861 = vmatpush1.bf16.msra.mxu0 %v264
    %862 = vmatprep.subr.bf16.mxu0 0
    %863 = vmatpush1.bf16.msra.mxu0 %v263
    %864 = vmatprep.subr.bf16.mxu0 0
    %865 = vmatpush1.bf16.msra.mxu0 %v262
    %866 = vmatprep.subr.bf16.mxu0 0
    %867 = vmatpush1.bf16.msra.mxu0 %v261
    %868 = vmatprep.subr.bf16.mxu0 0
    %869 = vmatpush1.bf16.msra.mxu0 %v260
    %870 = vmatprep.subr.bf16.mxu0 0
    %871 = vmatpush2.bf16.msra.mxu0 0
    %872 = vmatprep.subr.bf16.mxu0 0
    %873 = vmatpush2.bf16.msra.mxu0 0
    %874 = vmatprep.subr.bf16.mxu0 0
    %875 = vmatpush2.bf16.msra.mxu0 0
    %876 = vmatprep.subr.bf16.mxu0 0
    %877 = vmatpush2.bf16.msra.mxu0 0
    %878 = vmatprep.subr.bf16.mxu0 0
    %879 = vmatpush2.bf16.msra.mxu0 0
    %880 = vmatprep.subr.bf16.mxu0 0
    %881 = vmatpush2.bf16.msra.mxu0 0
    %882 = vmatprep.subr.bf16.mxu0 0
    %883 = vmatpush2.bf16.msra.mxu0 0
    %884 = vmatprep.subr.bf16.mxu0 0
    %885 = vmatpush2.bf16.msra.mxu0 0
    %886 = vmatprep.mubr.bf16.mxu0 0
    %887 = vmatmul.mubr.bf16.gmra.mxu0 %v853
    %v888 = vpop.f32.mrf.mxu0
    %v889 = vadd.f32 %v226, %v888
    %v890 = vpop.f32.mrf.mxu0
    %v891 = vpop.f32.mrf.mxu0
    %v892 = vadd.f32 %v226, %v891
    %v893 = vpop.f32.mrf.mxu0
    %894 = vdwg.mxu0
    %v895 = vmax.f32 %v889, 0.0
    %v896 = vmax.f32 %v892, 0.0
    %v897 = vpack.c.bf16 %v896, %v895
    %v899 = vsel %vm350, %v897, 0
    %901 = vmatprep.subr.bf16.mxu0 0
    %902 = vmatpush1.bf16.msra.mxu0 0
    %903 = vmatprep.subr.bf16.mxu0 0
    %904 = vmatpush1.bf16.msra.mxu0 0
    %905 = vmatprep.subr.bf16.mxu0 0
    %906 = vmatpush1.bf16.msra.mxu0 0
    %907 = vmatprep.subr.bf16.mxu0 0
    %908 = vmatpush1.bf16.msra.mxu0 0
    %909 = vmatprep.subr.bf16.mxu0 0
    %910 = vmatpush1.bf16.msra.mxu0 %v345
    %911 = vmatprep.subr.bf16.mxu0 0
    %912 = vmatpush1.bf16.msra.mxu0 %v344
    %913 = vmatprep.subr.bf16.mxu0 0
    %914 = vmatpush1.bf16.msra.mxu0 %v343
    %915 = vmatprep.subr.bf16.mxu0 0
    %916 = vmatpush1.bf16.msra.mxu0 %v342
    %917 = vmatprep.subr.bf16.mxu0 0
    %918 = vmatpush2.bf16.msra.mxu0 0
    %919 = vmatprep.subr.bf16.mxu0 0
    %920 = vmatpush2.bf16.msra.mxu0 0
    %921 = vmatprep.subr.bf16.mxu0 0
    %922 = vmatpush2.bf16.msra.mxu0 0
    %923 = vmatprep.subr.bf16.mxu0 0
    %924 = vmatpush2.bf16.msra.mxu0 0
    %925 = vmatprep.subr.bf16.mxu0 0
    %926 = vmatpush2.bf16.msra.mxu0 0
    %927 = vmatprep.subr.bf16.mxu0 0
    %928 = vmatpush2.bf16.msra.mxu0 0
    %929 = vmatprep.subr.bf16.mxu0 0
    %930 = vmatpush2.bf16.msra.mxu0 0
    %931 = vmatprep.subr.bf16.mxu0 0
    %932 = vmatpush2.bf16.msra.mxu0 0
    %933 = vmatprep.mubr.bf16.mxu0 0
    %934 = vmatmul.mubr.bf16.gmra.mxu0 %v899
    %v935 = vpop.f32.mrf.mxu0
    %v936 = vadd.f32 %v324, %v935
    %v937 = vpop.f32.mrf.mxu0
    %v938 = vpop.f32.mrf.mxu0
    %v939 = vadd.f32 %v324, %v938
    %v940 = vpop.f32.mrf.mxu0
    %941 = vdwg.mxu0
    %943 = vrot.lane.b32.xlu0 %v125, 96
    %v944 = vpop.permute.xlu0 %943
    %v946 = vsel %vm77, %v944, 0
    %948 = vmatprep.subr.bf16.mxu0 0
    %949 = vmatpush1.bf16.msra.mxu0 0
    %950 = vmatprep.subr.bf16.mxu0 0
    %951 = vmatpush1.bf16.msra.mxu0 0
    %952 = vmatprep.subr.bf16.mxu0 0
    %953 = vmatpush1.bf16.msra.mxu0 0
    %954 = vmatprep.subr.bf16.mxu0 0
    %955 = vmatpush1.bf16.msra.mxu0 0
    %956 = vmatprep.subr.bf16.mxu0 0
    %957 = vmatpush1.bf16.msra.mxu0 0
    %958 = vmatprep.subr.bf16.mxu0 0
    %959 = vmatpush1.bf16.msra.mxu0 0
    %960 = vmatprep.subr.bf16.mxu0 0
    %961 = vmatpush1.bf16.msra.mxu0 %v172
    %962 = vmatprep.subr.bf16.mxu0 0
    %963 = vmatpush1.bf16.msra.mxu0 %v171
    %964 = vmatprep.subr.bf16.mxu0 0
    %965 = vmatpush2.bf16.msra.mxu0 0
    %966 = vmatprep.subr.bf16.mxu0 0
    %967 = vmatpush2.bf16.msra.mxu0 0
    %968 = vmatprep.subr.bf16.mxu0 0
    %969 = vmatpush2.bf16.msra.mxu0 0
    %970 = vmatprep.subr.bf16.mxu0 0
    %971 = vmatpush2.bf16.msra.mxu0 0
    %972 = vmatprep.subr.bf16.mxu0 0
    %973 = vmatpush2.bf16.msra.mxu0 0
    %974 = vmatprep.subr.bf16.mxu0 0
    %975 = vmatpush2.bf16.msra.mxu0 0
    %976 = vmatprep.subr.bf16.mxu0 0
    %977 = vmatpush2.bf16.msra.mxu0 0
    %978 = vmatprep.subr.bf16.mxu0 0
    %979 = vmatpush2.bf16.msra.mxu0 0
    %980 = vmatprep.mubr.bf16.mxu0 0
    %981 = vmatmul.mubr.bf16.gmra.mxu0 %v946
    %v982 = vpop.f32.mrf.mxu0
    %v983 = vadd.f32 %v161, %v982
    %v984 = vpop.f32.mrf.mxu0
    %v985 = vpop.f32.mrf.mxu0
    %v986 = vadd.f32 %v161, %v985
    %v987 = vpop.f32.mrf.mxu0
    %988 = vdwg.mxu0
    %v989 = vmax.f32 %v983, 0.0
    %v990 = vmax.f32 %v986, 0.0
    %v991 = vpack.c.bf16 %v990, %v989
    %992 = vmatprep.subr.bf16.mxu0 0
    %993 = vmatpush1.bf16.msra.mxu0 %v267
    %994 = vmatprep.subr.bf16.mxu0 0
    %995 = vmatpush1.bf16.msra.mxu0 %v266
    %996 = vmatprep.subr.bf16.mxu0 0
    %997 = vmatpush1.bf16.msra.mxu0 %v265
    %998 = vmatprep.subr.bf16.mxu0 0
    %999 = vmatpush1.bf16.msra.mxu0 %v264
    %1000 = vmatprep.subr.bf16.mxu0 0
    %1001 = vmatpush1.bf16.msra.mxu0 %v263
    %1002 = vmatprep.subr.bf16.mxu0 0
    %1003 = vmatpush1.bf16.msra.mxu0 %v262
    %1004 = vmatprep.subr.bf16.mxu0 0
    %1005 = vmatpush1.bf16.msra.mxu0 %v261
    %1006 = vmatprep.subr.bf16.mxu0 0
    %1007 = vmatpush1.bf16.msra.mxu0 %v260
    %1008 = vmatprep.subr.bf16.mxu0 0
    %1009 = vmatpush2.bf16.msra.mxu0 0
    %1010 = vmatprep.subr.bf16.mxu0 0
    %1011 = vmatpush2.bf16.msra.mxu0 0
    %1012 = vmatprep.subr.bf16.mxu0 0
    %1013 = vmatpush2.bf16.msra.mxu0 0
    %1014 = vmatprep.subr.bf16.mxu0 0
    %1015 = vmatpush2.bf16.msra.mxu0 0
    %1016 = vmatprep.subr.bf16.mxu0 0
    %1017 = vmatpush2.bf16.msra.mxu0 0
    %1018 = vmatprep.subr.bf16.mxu0 0
    %1019 = vmatpush2.bf16.msra.mxu0 0
    %1020 = vmatprep.subr.bf16.mxu0 0
    %1021 = vmatpush2.bf16.msra.mxu0 0
    %1022 = vmatprep.subr.bf16.mxu0 0
    %1023 = vmatpush2.bf16.msra.mxu0 0
    %1024 = vmatprep.mubr.bf16.mxu0 0
    %1025 = vmatmul.mubr.bf16.gmra.mxu0 %v991
    %v1026 = vpop.f32.mrf.mxu0
    %v1027 = vadd.f32 %v226, %v1026
    %v1028 = vpop.f32.mrf.mxu0
    %v1029 = vpop.f32.mrf.mxu0
    %v1030 = vadd.f32 %v226, %v1029
    %v1031 = vpop.f32.mrf.mxu0
    %1032 = vdwg.mxu0
    %v1033 = vmax.f32 %v1027, 0.0
    %v1034 = vmax.f32 %v1030, 0.0
    %v1035 = vpack.c.bf16 %v1034, %v1033
    %v1037 = vsel %vm350, %v1035, 0
    %1039 = vmatprep.subr.bf16.mxu0 0
    %1040 = vmatpush1.bf16.msra.mxu0 0
    %1041 = vmatprep.subr.bf16.mxu0 0
    %1042 = vmatpush1.bf16.msra.mxu0 0
    %1043 = vmatprep.subr.bf16.mxu0 0
    %1044 = vmatpush1.bf16.msra.mxu0 0
    %1045 = vmatprep.subr.bf16.mxu0 0
    %1046 = vmatpush1.bf16.msra.mxu0 0
    %1047 = vmatprep.subr.bf16.mxu0 0
    %1048 = vmatpush1.bf16.msra.mxu0 %v345
    %1049 = vmatprep.subr.bf16.mxu0 0
    %1050 = vmatpush1.bf16.msra.mxu0 %v344
    %1051 = vmatprep.subr.bf16.mxu0 0
    %1052 = vmatpush1.bf16.msra.mxu0 %v343
    %1053 = vmatprep.subr.bf16.mxu0 0
    %1054 = vmatpush1.bf16.msra.mxu0 %v342
    %1055 = vmatprep.subr.bf16.mxu0 0
    %1056 = vmatpush2.bf16.msra.mxu0 0
    %1057 = vmatprep.subr.bf16.mxu0 0
    %1058 = vmatpush2.bf16.msra.mxu0 0
    %1059 = vmatprep.subr.bf16.mxu0 0
    %1060 = vmatpush2.bf16.msra.mxu0 0
    %1061 = vmatprep.subr.bf16.mxu0 0
    %1062 = vmatpush2.bf16.msra.mxu0 0
    %1063 = vmatprep.subr.bf16.mxu0 0
    %1064 = vmatpush2.bf16.msra.mxu0 0
    %1065 = vmatprep.subr.bf16.mxu0 0
    %1066 = vmatpush2.bf16.msra.mxu0 0
    %1067 = vmatprep.subr.bf16.mxu0 0
    %1068 = vmatpush2.bf16.msra.mxu0 0
    %1069 = vmatprep.subr.bf16.mxu0 0
    %1070 = vmatpush2.bf16.msra.mxu0 0
    %1071 = vmatprep.mubr.bf16.mxu0 0
    %1072 = vmatmul.mubr.bf16.gmra.mxu0 %v1037
    %v1073 = vpop.f32.mrf.mxu0
    %v1074 = vadd.f32 %v324, %v1073
    %v1075 = vpop.f32.mrf.mxu0
    %v1076 = vpop.f32.mrf.mxu0
    %v1077 = vadd.f32 %v324, %v1076
    %v1078 = vpop.f32.mrf.mxu0
    %1079 = vdwg.mxu0
    %1082 = vrot.lane.b32.xlu0 %v527, 16
    %v1083 = vpop.permute.xlu0 %1082
    %1084 = vrot.lane.b32.xlu0 %v530, 16
    %v1085 = vpop.permute.xlu0 %1084
    %1090 = vrot.lane.b32.xlu0 %v664, 32
    %v1091 = vpop.permute.xlu0 %1090
    %1092 = vrot.lane.b32.xlu0 %v667, 32
    %v1093 = vpop.permute.xlu0 %1092
    %1098 = vrot.lane.b32.xlu0 %v801, 48
    %v1099 = vpop.permute.xlu0 %1098
    %1100 = vrot.lane.b32.xlu0 %v804, 48
    %v1101 = vpop.permute.xlu0 %1100
    %1106 = vrot.lane.b32.xlu0 %v936, 64
    %v1107 = vpop.permute.xlu0 %1106
    %1108 = vrot.lane.b32.xlu0 %v939, 64
    %v1109 = vpop.permute.xlu0 %1108
    %1114 = vrot.lane.b32.xlu0 %v1074, 80
    %v1115 = vpop.permute.xlu0 %1114
    %1116 = vrot.lane.b32.xlu0 %v1077, 80
    %v1117 = vpop.permute.xlu0 %1116
    %1122 = vrot.lane.b32.xlu0 %v389, 80
    %v1123 = vpop.permute.xlu0 %1122
    %1124 = vrot.lane.b32.xlu0 %v392, 80
    %v1125 = vpop.permute.xlu0 %1124
    %1128 = vrot.lane.b32.xlu0 %v527, 81
    %v1129 = vpop.permute.xlu0 %1128
    %1130 = vrot.lane.b32.xlu0 %v530, 81
    %v1131 = vpop.permute.xlu0 %1130
    %1134 = vrot.lane.b32.xlu0 %v664, 82
    %v1135 = vpop.permute.xlu0 %1134
    %1136 = vrot.lane.b32.xlu0 %v667, 82
    %v1137 = vpop.permute.xlu0 %1136
    %1140 = vrot.lane.b32.xlu0 %v801, 83
    %v1141 = vpop.permute.xlu0 %1140
    %1142 = vrot.lane.b32.xlu0 %v804, 83
    %v1143 = vpop.permute.xlu0 %1142
    %1146 = vrot.lane.b32.xlu0 %v936, 84
    %v1147 = vpop.permute.xlu0 %1146
    %1148 = vrot.lane.b32.xlu0 %v939, 84
    %v1149 = vpop.permute.xlu0 %1148
    %1152 = vrot.lane.b32.xlu0 %v1074, 85
    %v1153 = vpop.permute.xlu0 %1152
    %1154 = vrot.lane.b32.xlu0 %v1077, 85
    %v1155 = vpop.permute.xlu0 %1154
    %vm1158 = vcmask 130048
    %v1159 = vsel %vm1158, %v389, %v1083
    %v1160 = vsel %vm1158, %v392, %v1085
    %v1161 = vsel %vm77, %v1159, %v1091
    %v1162 = vsel %vm77, %v1160, %v1093
    %vm1163 = vcmask 392192
    %v1164 = vsel %vm1163, %v1161, %v1099
    %v1165 = vsel %vm1163, %v1162, %v1101
    %v1166 = vsel %vm350, %v1164, %v1107
    %v1167 = vsel %vm350, %v1165, %v1109
    %vm1168 = vcmask 654336
    %v1169 = vsel %vm1168, %v1166, %v1115
    %v1170 = vsel %vm1168, %v1167, %v1117
    %vm1171 = vcmask 785408
    %v1172 = vsel %vm1171, %v1169, %v1123
    %v1173 = vsel %vm1171, %v1170, %v1125
    %vm1174 = vcmask 793600
    %v1175 = vsel %vm1174, %v1172, %v1129
    %v1176 = vsel %vm1174, %v1173, %v1131
    %vm1177 = vcmask 801792
    %v1178 = vsel %vm1177, %v1175, %v1135
    %v1179 = vsel %vm1177, %v1176, %v1137
    %vm1180 = vcmask 809984
    %v1181 = vsel %vm1180, %v1178, %v1141
    %v1182 = vsel %vm1180, %v1179, %v1143
    %vm1183 = vcmask 818176
    %v1184 = vsel %vm1183, %v1181, %v1147
    %v1185 = vsel %vm1183, %v1182, %v1149
    %vm1186 = vcmask 826368
    %v1187 = vsel %vm1186, %v1184, %v1153
    %v1188 = vsel %vm1186, %v1185, %v1155
    %vm1189 = vcmask 834560
    %v1190 = vsel %vm1189, %v1187, 0.0
    %v1191 = vsel %vm1189, %v1188, 0.0
    %1192 = vst [vmem:[#allocation2] sm:$0xff] %v1190
    %1193 = vst [vmem:[#allocation2 + $0x8] sm:$0xff] %v1191
    // Predicated region
    $region38: #{tpu_custom_call.1} parent=1 // pred_check
      _
    $region39: #{tpu_custom_call.1} parent=1 // pred_check_branch
      %1195 = sbr.rel (0) target = $region41
    $region40: #{tpu_custom_call.1} parent=1 // pred_region
      %s1197 = ssub.s32 256, 256
      %1198 = vsyncadd [#allocation3], %s1197
      %s1199 = sshll.u32 [#allocation2], 4
      %s1200 = int_to_ptr.vmem [resolvable:$true] %s1199
      %1205 = dma.vmem_to_hbm [thread:$0]  %s1200, 256, %s9, [#allocation3], 128, 128, 8
    $region41: #{tpu_custom_call.1} parent=1 // pred_fallthru
      _
    // Predicated region
    $region42: #{tpu_custom_call.1} parent=1 // pred_check
      _
    $region43: #{tpu_custom_call.1} parent=1 // pred_check_branch
      %1207 = sbr.rel (0) target = $region45
    $region44: #{tpu_custom_call.1} parent=1 // pred_region
      %1208 = dma.done [#allocation3], 256
    $region45: #{tpu_custom_call.1} parent=1 // pred_fallthru
      _
    %1209 = vsyncpa [#allocation3], 1

</llo_original>
